<compile_context>
chip_gen: v6e
topology: v6e:2x2x1
jax: 0.10.0
libtpu: 0.0.40
codegen_flags: <defaults>
</compile_context>

<pallas_src>
import jax
import jax.numpy as jnp
from jax.experimental import pallas as pl
from jax.experimental.pallas import tpu as pltpu


# ----------------------------- Pallas kernel ---------------------------------
def hybrid_gnn_kernel(x0_ref, ea_ref, g_ref, st_ref, m_ref, invc_ref, rdkit_ref,
                      wc_ref, bc_ref, wm1_ref, bm1_ref, wm2_ref, bm2_ref,
                      wm3_ref, bm3_ref, out_ref, x_state, agg):
    layer = pl.program_id(0)
    etile = pl.program_id(1)
    n_layers = pl.num_programs(0)
    n_etiles = pl.num_programs(1)
    bf16 = jnp.bfloat16
    f32 = jnp.float32
    D = x_state.shape[1]

    # initialize node state with atom embeddings on the very first grid step
    @pl.when((layer == 0) & (etile == 0))
    def _init_nodes():
        x_state[...] = x0_ref[...]

    # reset the per-layer edge aggregator at the start of each layer
    @pl.when(etile == 0)
    def _reset_agg():
        agg[...] = jnp.zeros_like(agg)

    # --- partial message passing for this edge tile (bf16 MXU, f32 accumulate) ---
    xb = x_state[...].astype(bf16)                                       # (N, D)
    x_src = jnp.dot(g_ref[...], xb, preferred_element_type=f32)          # (TE, D)
    msg = jnp.maximum(x_src + ea_ref[...].astype(f32), 0.0)              # (TE, D) f32
    # scatter-sum to destination nodes: S @ msg, with S stored transposed as (E, N)
    agg[...] += jax.lax.dot_general(
        st_ref[...], msg.astype(bf16),
        dimension_numbers=(((0,), (0,)), ((), ())),
        preferred_element_type=f32)                                      # (N, D)

    # --- finalize GINEConv layer (eps = 0):  x <- MLP(x + agg) ---
    @pl.when(etile == n_etiles - 1)
    def _finish_layer():
        w = wc_ref[layer]                                                # (2D, D) bf16
        b = bc_ref[layer]                                                # (2, D)  f32
        h = x_state[...] + agg[...]
        h = jnp.maximum(
            jnp.dot(h.astype(bf16), w[:D, :], preferred_element_type=f32)
            + b[0:1, :], 0.0)
        x_state[...] = (jnp.dot(h.astype(bf16), w[D:, :],
                                preferred_element_type=f32) + b[1:2, :])

    # --- after the last layer: global mean pool + head MLP (lane-dense output) ---
    @pl.when((layer == n_layers - 1) & (etile == n_etiles - 1))
    def _head():
        pooled = jnp.dot(m_ref[...], x_state[...].astype(bf16),
                         preferred_element_type=f32)                     # (B, D)
        xg = pooled * invc_ref[...]                                      # mean pool in f32
        # cat([xg, rdkit]) @ Wm1  ==  xg @ Wm1[:D] + rdkit @ Wm1[D:]
        h1 = (jnp.dot(xg.astype(bf16), wm1_ref[:D, :], preferred_element_type=f32)
              + jnp.dot(rdkit_ref[...].astype(bf16), wm1_ref[D:, :],
                        preferred_element_type=f32)
              + bm1_ref[...])
        h1 = jnp.maximum(h1, 0.0)
        # TODO(synk): Dropout omitted (eval-mode semantics -> identity).
        h2 = jnp.maximum(
            jnp.dot(h1.astype(bf16), wm2_ref[...], preferred_element_type=f32)
            + bm2_ref[...], 0.0)
        out_ref[...] = (jnp.dot(h2.astype(bf16), wm3_ref[...],
                                preferred_element_type=f32) + bm3_ref[...])


def hybrid_gnn_pallas(x0, ea, G, St, M, invc, rdkit, params, *, edge_tile=None):
    f32, bf16 = jnp.float32, jnp.bfloat16
    N, D = x0.shape
    E = ea.shape[0]
    B, RD = rdkit.shape
    n_layers = 2
    if edge_tile is None:
        edge_tile = E
    assert E % edge_tile == 0 and (edge_tile % 8 == 0 or edge_tile == E)

    # ---- pack / cast operands (fewer DMA descriptors, bf16 MXU operands) ----
    wc = jnp.stack([
        jnp.concatenate([params["w11"], params["w12"]], axis=0),
        jnp.concatenate([params["w21"], params["w22"]], axis=0)]).astype(bf16)   # (2, 2D, D)
    bc = jnp.stack([
        jnp.concatenate([params["b11"], params["b12"]], axis=0),
        jnp.concatenate([params["b21"], params["b22"]], axis=0)]).astype(f32)    # (2, 2, D)
    wm1 = jnp.concatenate([params["wm1g"], params["wm1r"]], axis=0).astype(bf16)  # (D+RD, H)
    wm2 = params["wm2"].astype(bf16)
    H = wm1.shape[1]
    H2 = wm2.shape[1]
    # lane-dense final projection: pad (H2, 1) -> (H2, 128); bias padded likewise
    wm3 = jnp.zeros((H2, 128), f32).at[:, :1].set(params["wm3"]).astype(bf16)
    bm3 = jnp.zeros((1, 128), f32).at[:, :1].set(params["bm3"])

    args = (x0.astype(f32), ea.astype(bf16), G.astype(bf16), St.astype(bf16),
            M.astype(bf16), invc.astype(f32), rdkit.astype(f32),
            wc, bc, wm1, params["bm1"].astype(f32),
            wm2, params["bm2"].astype(f32), wm3, bm3)

    grid = (n_layers, E // edge_tile)
    in_specs = [
        pl.BlockSpec((N, D), lambda l, e: (0, 0)),                   # x0
        pl.BlockSpec((edge_tile, D), lambda l, e: (e, 0)),           # edge attrs
        pl.BlockSpec((edge_tile, N), lambda l, e: (e, 0)),           # gather G
        pl.BlockSpec((edge_tile, N), lambda l, e: (e, 0)),           # scatter S^T
        pl.BlockSpec((B, N), lambda l, e: (0, 0)),                   # pool membership
        pl.BlockSpec((B, 1), lambda l, e: (0, 0)),                   # 1/count (f32)
        pl.BlockSpec((B, RD), lambda l, e: (0, 0)),                  # rdkit feats
        pl.BlockSpec((n_layers, 2 * D, D), lambda l, e: (0, 0, 0)),  # packed conv W
        pl.BlockSpec((n_layers, 2, D), lambda l, e: (0, 0, 0)),      # packed conv b
        pl.BlockSpec((D + RD, H), lambda l, e: (0, 0)),              # packed head W1
        pl.BlockSpec((1, H), lambda l, e: (0, 0)),                   # bm1
        pl.BlockSpec((H, H2), lambda l, e: (0, 0)),                  # wm2
        pl.BlockSpec((1, H2), lambda l, e: (0, 0)),                  # bm2
        pl.BlockSpec((H2, 128), lambda l, e: (0, 0)),                # wm3 (lane padded)
        pl.BlockSpec((1, 128), lambda l, e: (0, 0)),                 # bm3 (lane padded)
    ]

    out_padded = pl.pallas_call(
        hybrid_gnn_kernel,
        out_shape=jax.ShapeDtypeStruct((B, 128), f32),
        grid_spec=pltpu.PrefetchScalarGridSpec(
            num_scalar_prefetch=0,
            grid=grid,
            in_specs=in_specs,
            out_specs=pl.BlockSpec((B, 128), lambda l, e: (0, 0)),
            scratch_shapes=[pltpu.VMEM((N, D), f32),      # node state (carried)
                            pltpu.VMEM((N, D), f32)]),    # edge-agg accumulator
        compiler_params=pltpu.CompilerParams(
            dimension_semantics=("arbitrary", "arbitrary"),
            vmem_limit_bytes=32 * 1024 * 1024),
    )(*args)
    return out_padded[:, :1]


# ----------------------------- pure-JAX reference ----------------------------
def hybrid_gnn_ref(x0, ea, G, St, M, invc, rdkit, p, emulate_bf16=False):
    f32 = jnp.float32
    md = jnp.bfloat16 if emulate_bf16 else f32

    def mm(a, b):
        return jnp.dot(a.astype(md), b.astype(md), preferred_element_type=f32)

    S = St.T
    ea_e = ea.astype(md).astype(f32)

    def gine(X, w1, b1, w2, b2):
        msg = jnp.maximum(mm(G, X) + ea_e, 0.0)
        h = X + mm(S, msg)
        h = jnp.maximum(mm(h, w1) + b1, 0.0)
        return mm(h, w2) + b2

    X = gine(x0, p["w11"], p["b11"], p["w12"], p["b12"])
    X = gine(X, p["w21"], p["b21"], p["w22"], p["b22"])
    Xg = mm(M, X) * invc
    h1 = jnp.maximum(mm(Xg, p["wm1g"]) + mm(rdkit, p["wm1r"]) + p["bm1"], 0.0)
    h2 = jnp.maximum(mm(h1, p["wm2"]) + p["bm2"], 0.0)
    return mm(h2, p["wm3"]) + p["bm3"]


# ----------------------------- main -------------------------------------------
if __name__ == "__main__":
    key = jax.random.PRNGKey(0)

    # small shapes implied by the module
    N_NODES, N_EDGES, B = 16, 32, 2
    GNN_DIM, RDKIT_DIM, HIDDEN = 32, 8, 32
    N_ATOM_FEATS, ATOM_VOCAB = 3, 10
    N_BOND_FEATS, BOND_VOCAB = 2, 5

    keys = jax.random.split(key, 24)

    # --- graph data (synthetic, deterministic) ---
    atom_x = jax.random.randint(keys[0], (N_NODES, N_ATOM_FEATS), 0, ATOM_VOCAB)        # data.x
    edge_attr_int = jax.random.randint(keys[1], (N_EDGES, N_BOND_FEATS), 0, BOND_VOCAB)  # data.edge_attr
    src = jax.random.randint(keys[2], (N_EDGES,), 0, N_NODES)                            # edge_index[0]
    dst = jax.random.randint(keys[3], (N_EDGES,), 0, N_NODES)                            # edge_index[1]
    batch = jnp.concatenate([jnp.zeros(N_NODES // 2, jnp.int32),
                             jnp.ones(N_NODES - N_NODES // 2, jnp.int32)])               # data.batch
    rdkit_feats = jax.random.normal(keys[4], (B, RDKIT_DIM), jnp.float32)                # data.rdkit_feats

    # --- deterministic parameters ---
    def w(k, shape, scale=0.1):
        return scale * jax.random.normal(k, shape, jnp.float32)

    atom_tables = [w(keys[5 + f], (ATOM_VOCAB, GNN_DIM)) for f in range(N_ATOM_FEATS)]
    bond_tables = [w(keys[8 + f], (BOND_VOCAB, GNN_DIM)) for f in range(N_BOND_FEATS)]

    params = {
        # GINEConv 1 internal MLP
        "w11": w(keys[10], (GNN_DIM, GNN_DIM)), "b11": w(keys[11], (1, GNN_DIM)),
        "w12": w(keys[12], (GNN_DIM, GNN_DIM)), "b12": w(keys[13], (1, GNN_DIM)),
        # GINEConv 2 internal MLP
        "w21": w(keys[14], (GNN_DIM, GNN_DIM)), "b21": w(keys[15], (1, GNN_DIM)),
        "w22": w(keys[16], (GNN_DIM, GNN_DIM)), "b22": w(keys[17], (1, GNN_DIM)),
        # head MLP: Linear(gnn+rdkit, hidden) kept as two logical blocks, packed in wrapper
        "wm1g": w(keys[18], (GNN_DIM, HIDDEN)), "wm1r": w(keys[19], (RDKIT_DIM, HIDDEN)),
        "bm1": w(keys[20], (1, HIDDEN)),
        "wm2": w(keys[21], (HIDDEN, HIDDEN // 2)), "bm2": w(keys[22], (1, HIDDEN // 2)),
        "wm3": w(keys[23], (HIDDEN // 2, 1)), "bm3": jnp.zeros((1, 1), jnp.float32),
    }

    # --- JAX glue: encoders (embedding-sum gathers) and dense graph operators ---
    x0 = sum(atom_tables[f][atom_x[:, f]] for f in range(N_ATOM_FEATS))          # AtomEncoder
    ea = sum(bond_tables[f][edge_attr_int[:, f]] for f in range(N_BOND_FEATS))   # BondEncoder

    G = jax.nn.one_hot(src, N_NODES, dtype=jnp.float32)        # (E, N): x_src = G @ X   (0/1)
    St = jax.nn.one_hot(dst, N_NODES, dtype=jnp.float32)       # (E, N): scatter-sum = St.T @ msg
    M = jax.nn.one_hot(batch, B, dtype=jnp.float32).T          # (B, N): 0/1 graph membership
    counts = jnp.maximum(jnp.sum(M, axis=1, keepdims=True), 1.0)
    invc = 1.0 / counts                                         # (B, 1): mean-pool scale (f32)

    out = hybrid_gnn_pallas(x0, ea, G, St, M, invc, rdkit_feats, params, edge_tile=16)
    out = jax.block_until_ready(out)
    assert out.shape == (B, 1)

    # tight check vs. a reference that emulates the kernel's bf16-operand / f32-accum numerics
    ref_emu = hybrid_gnn_ref(x0, ea, G, St, M, invc, rdkit_feats, params, emulate_bf16=True)
    assert jnp.allclose(out, ref_emu, atol=1e-3, rtol=1e-3), (out, ref_emu)

    # loose check vs. pure-f32 module semantics (difference is only bf16 rounding)
    ref_f32 = hybrid_gnn_ref(x0, ea, G, St, M, invc, rdkit_feats, params, emulate_bf16=False)
    assert jnp.allclose(out, ref_f32, atol=5e-2, rtol=5e-2), (out, ref_f32)

    print("KERNEL_OK")
</pallas_src>

<mosaic_0001>
module attributes {stable_mosaic.version = 11 : i64} {
  func.func @hybrid_gnn_kernel(%arg0: i32, %arg1: i32, %arg2: memref<16x32xf32, #tpu.memory_space<vmem>>, %arg3: memref<16x32xbf16, #tpu.memory_space<vmem>>, %arg4: memref<16x16xbf16, #tpu.memory_space<vmem>>, %arg5: memref<16x16xbf16, #tpu.memory_space<vmem>>, %arg6: memref<2x16xbf16, #tpu.memory_space<vmem>>, %arg7: memref<2x1xf32, #tpu.memory_space<vmem>>, %arg8: memref<2x8xf32, #tpu.memory_space<vmem>>, %arg9: memref<2x64x32xbf16, #tpu.memory_space<vmem>>, %arg10: memref<2x2x32xf32, #tpu.memory_space<vmem>>, %arg11: memref<40x32xbf16, #tpu.memory_space<vmem>>, %arg12: memref<1x32xf32, #tpu.memory_space<vmem>>, %arg13: memref<32x16xbf16, #tpu.memory_space<vmem>>, %arg14: memref<1x16xf32, #tpu.memory_space<vmem>>, %arg15: memref<16x128xbf16, #tpu.memory_space<vmem>>, %arg16: memref<1x128xf32, #tpu.memory_space<vmem>>, %arg17: memref<2x128xf32, #tpu.memory_space<vmem>>, %arg18: memref<16x32xf32, #tpu.memory_space<vmem>>, %arg19: memref<16x32xf32, #tpu.memory_space<vmem>>) attributes {dimension_semantics = [#tpu.dimension_semantics<arbitrary>, #tpu.dimension_semantics<arbitrary>], iteration_bounds = array<i64: 2, 2>, scalar_prefetch = 0 : i64, scratch_operands = 2 : i64, tpu.core_type = #tpu.core_type<tc>, window_params = [{pipeline_mode = #tpu.pipeline_mode<synchronous>, transform_indices = @transform_0, window_bounds = array<i64: 16, 32>}, {transform_indices = @transform_1, window_bounds = array<i64: 16, 32>}, {transform_indices = @transform_2, window_bounds = array<i64: 16, 16>}, {transform_indices = @transform_3, window_bounds = array<i64: 16, 16>}, {pipeline_mode = #tpu.pipeline_mode<synchronous>, transform_indices = @transform_4, window_bounds = array<i64: 2, 16>}, {pipeline_mode = #tpu.pipeline_mode<synchronous>, transform_indices = @transform_5, window_bounds = array<i64: 2, 1>}, {pipeline_mode = #tpu.pipeline_mode<synchronous>, transform_indices = @transform_6, window_bounds = array<i64: 2, 8>}, {pipeline_mode = #tpu.pipeline_mode<synchronous>, transform_indices = @transform_7, window_bounds = array<i64: 2, 64, 32>}, {pipeline_mode = #tpu.pipeline_mode<synchronous>, transform_indices = @transform_8, window_bounds = array<i64: 2, 2, 32>}, {pipeline_mode = #tpu.pipeline_mode<synchronous>, transform_indices = @transform_9, window_bounds = array<i64: 40, 32>}, {pipeline_mode = #tpu.pipeline_mode<synchronous>, transform_indices = @transform_10, window_bounds = array<i64: 1, 32>}, {pipeline_mode = #tpu.pipeline_mode<synchronous>, transform_indices = @transform_11, window_bounds = array<i64: 32, 16>}, {pipeline_mode = #tpu.pipeline_mode<synchronous>, transform_indices = @transform_12, window_bounds = array<i64: 1, 16>}, {pipeline_mode = #tpu.pipeline_mode<synchronous>, transform_indices = @transform_13, window_bounds = array<i64: 16, 128>}, {pipeline_mode = #tpu.pipeline_mode<synchronous>, transform_indices = @transform_14, window_bounds = array<i64: 1, 128>}, {pipeline_mode = #tpu.pipeline_mode<synchronous>, transform_indices = @transform_15, window_bounds = array<i64: 2, 128>}]} {
    %c0_i32 = arith.constant 0 : i32
    %0 = arith.cmpi eq, %arg0, %c0_i32 : i32
    %c0_i32_0 = arith.constant 0 : i32
    %1 = arith.cmpi eq, %arg1, %c0_i32_0 : i32
    %2 = arith.andi %0, %1 : i1
    %3 = arith.extui %2 : i1 to i32
    %c0_i32_1 = arith.constant 0 : i32
    %4 = arith.cmpi ne, %3, %c0_i32_1 : i32
    scf.if %4 {
      %c0_21 = arith.constant 0 : index
      %c0_22 = arith.constant 0 : index
      %31 = vector.load %arg2[%c0_21, %c0_22] : memref<16x32xf32, #tpu.memory_space<vmem>>, vector<16x32xf32>
      %c0_23 = arith.constant 0 : index
      %c0_24 = arith.constant 0 : index
      %32 = vector.load %arg18[%c0_23, %c0_24] : memref<16x32xf32, #tpu.memory_space<vmem>>, vector<16x32xf32>
      tpu.vector_store %arg18[%c0_23, %c0_24], %31 {strides = array<i32>} : memref<16x32xf32, #tpu.memory_space<vmem>>, vector<16x32xf32>,
    } else {
    }
    %c0_i32_2 = arith.constant 0 : i32
    %5 = arith.cmpi eq, %arg1, %c0_i32_2 : i32
    %6 = arith.extui %5 : i1 to i32
    %c0_i32_3 = arith.constant 0 : i32
    %7 = arith.cmpi ne, %6, %c0_i32_3 : i32
    scf.if %7 {
      %cst_21 = arith.constant 0.000000e+00 : f32
      %31 = vector.broadcast %cst_21 : f32 to vector<16x32xf32>
      %c0_22 = arith.constant 0 : index
      %c0_23 = arith.constant 0 : index
      %32 = vector.load %arg19[%c0_22, %c0_23] : memref<16x32xf32, #tpu.memory_space<vmem>>, vector<16x32xf32>
      tpu.vector_store %arg19[%c0_22, %c0_23], %31 {strides = array<i32>} : memref<16x32xf32, #tpu.memory_space<vmem>>, vector<16x32xf32>,
    } else {
    }
    %c0 = arith.constant 0 : index
    %c0_4 = arith.constant 0 : index
    %8 = vector.load %arg18[%c0, %c0_4] : memref<16x32xf32, #tpu.memory_space<vmem>>, vector<16x32xf32>
    %9 = arith.truncf %8 : vector<16x32xf32> to vector<16x32xbf16>
    %c0_5 = arith.constant 0 : index
    %c0_6 = arith.constant 0 : index
    %10 = vector.load %arg4[%c0_5, %c0_6] : memref<16x16xbf16, #tpu.memory_space<vmem>>, vector<16x16xbf16>
    %cst = arith.constant dense<0.000000e+00> : vector<16x32xf32>
    %11 = tpu.matmul %10, %9, %cst {dimension_numbers = #tpu.dot_dimension_numbers<[1], [0], [0], [1], [0, 0, 1, 1], [], []>} : vector<16x16xbf16>, vector<16x32xbf16>, vector<16x32xf32> -> vector<16x32xf32>
    %c0_7 = arith.constant 0 : index
    %c0_8 = arith.constant 0 : index
    %12 = vector.load %arg3[%c0_7, %c0_8] : memref<16x32xbf16, #tpu.memory_space<vmem>>, vector<16x32xbf16>
    %13 = arith.extf %12 : vector<16x32xbf16> to vector<16x32xf32>
    %14 = arith.addf %11, %13 : vector<16x32xf32>
    %cst_9 = arith.constant 0.000000e+00 : f32
    %15 = vector.broadcast %cst_9 : f32 to vector<16x32xf32>
    %16 = arith.maximumf %14, %15 : vector<16x32xf32>
    %c0_10 = arith.constant 0 : index
    %c0_11 = arith.constant 0 : index
    %17 = vector.load %arg19[%c0_10, %c0_11] : memref<16x32xf32, #tpu.memory_space<vmem>>, vector<16x32xf32>
    %c0_12 = arith.constant 0 : index
    %c0_13 = arith.constant 0 : index
    %18 = vector.load %arg5[%c0_12, %c0_13] : memref<16x16xbf16, #tpu.memory_space<vmem>>, vector<16x16xbf16>
    %19 = arith.truncf %16 : vector<16x32xf32> to vector<16x32xbf16>
    %cst_14 = arith.constant dense<0.000000e+00> : vector<16x32xf32>
    %20 = tpu.matmul %18, %19, %cst_14 {dimension_numbers = #tpu.dot_dimension_numbers<[0], [0], [1], [1], [0, 1, 1, 1], [], []>} : vector<16x16xbf16>, vector<16x32xbf16>, vector<16x32xf32> -> vector<16x32xf32>
    %21 = arith.addf %17, %20 : vector<16x32xf32>
    %c0_15 = arith.constant 0 : index
    %c0_16 = arith.constant 0 : index
    %22 = vector.load %arg19[%c0_15, %c0_16] : memref<16x32xf32, #tpu.memory_space<vmem>>, vector<16x32xf32>
    tpu.vector_store %arg19[%c0_15, %c0_16], %21 {strides = array<i32>} : memref<16x32xf32, #tpu.memory_space<vmem>>, vector<16x32xf32>,
    %c1_i32 = arith.constant 1 : i32
    %23 = arith.cmpi eq, %arg1, %c1_i32 : i32
    %24 = arith.extui %23 : i1 to i32
    %c0_i32_17 = arith.constant 0 : i32
    %25 = arith.cmpi ne, %24, %c0_i32_17 : i32
    scf.if %25 {
      %31 = arith.index_cast %arg0 : i32 to index
      %c0_21 = arith.constant 0 : index
      %c0_22 = arith.constant 0 : index
      %32 = vector.load %arg9[%31, %c0_21, %c0_22] : memref<2x64x32xbf16, #tpu.memory_space<vmem>>, vector<1x64x32xbf16>
      %33 = vector.shape_cast %32 : vector<1x64x32xbf16> to vector<64x32xbf16>
      %34 = arith.index_cast %arg0 : i32 to index
      %c0_23 = arith.constant 0 : index
      %c0_24 = arith.constant 0 : index
      %35 = vector.load %arg10[%34, %c0_23, %c0_24] : memref<2x2x32xf32, #tpu.memory_space<vmem>>, vector<1x2x32xf32>
      %36 = vector.shape_cast %35 : vector<1x2x32xf32> to vector<2x32xf32>
      %c0_25 = arith.constant 0 : index
      %c0_26 = arith.constant 0 : index
      %37 = vector.load %arg18[%c0_25, %c0_26] : memref<16x32xf32, #tpu.memory_space<vmem>>, vector<16x32xf32>
      %c0_27 = arith.constant 0 : index
      %c0_28 = arith.constant 0 : index
      %38 = vector.load %arg19[%c0_27, %c0_28] : memref<16x32xf32, #tpu.memory_space<vmem>>, vector<16x32xf32>
      %39 = arith.addf %37, %38 : vector<16x32xf32>
      %40 = arith.truncf %39 : vector<16x32xf32> to vector<16x32xbf16>
      %41 = vector.extract_strided_slice %33 {offsets = [0, 0], sizes = [32, 32], strides = [1, 1]} : vector<64x32xbf16> to vector<32x32xbf16>
      %cst_29 = arith.constant dense<0.000000e+00> : vector<16x32xf32>
      %42 = tpu.matmul %40, %41, %cst_29 {dimension_numbers = #tpu.dot_dimension_numbers<[1], [0], [0], [1], [0, 0, 1, 1], [], []>} : vector<16x32xbf16>, vector<32x32xbf16>, vector<16x32xf32> -> vector<16x32xf32>
      %43 = vector.extract_strided_slice %36 {offsets = [0, 0], sizes = [1, 32], strides = [1, 1]} : vector<2x32xf32> to vector<1x32xf32>
      %44 = vector.broadcast %43 : vector<1x32xf32> to vector<16x32xf32>
      %45 = arith.addf %42, %44 : vector<16x32xf32>
      %cst_30 = arith.constant 0.000000e+00 : f32
      %46 = vector.broadcast %cst_30 : f32 to vector<16x32xf32>
      %47 = arith.maximumf %45, %46 : vector<16x32xf32>
      %48 = arith.truncf %47 : vector<16x32xf32> to vector<16x32xbf16>
      %49 = vector.extract_strided_slice %33 {offsets = [32, 0], sizes = [32, 32], strides = [1, 1]} : vector<64x32xbf16> to vector<32x32xbf16>
      %cst_31 = arith.constant dense<0.000000e+00> : vector<16x32xf32>
      %50 = tpu.matmul %48, %49, %cst_31 {dimension_numbers = #tpu.dot_dimension_numbers<[1], [0], [0], [1], [0, 0, 1, 1], [], []>} : vector<16x32xbf16>, vector<32x32xbf16>, vector<16x32xf32> -> vector<16x32xf32>
      %51 = vector.extract_strided_slice %36 {offsets = [1, 0], sizes = [1, 32], strides = [1, 1]} : vector<2x32xf32> to vector<1x32xf32>
      %52 = vector.broadcast %51 : vector<1x32xf32> to vector<16x32xf32>
      %53 = arith.addf %50, %52 : vector<16x32xf32>
      %c0_32 = arith.constant 0 : index
      %c0_33 = arith.constant 0 : index
      %54 = vector.load %arg18[%c0_32, %c0_33] : memref<16x32xf32, #tpu.memory_space<vmem>>, vector<16x32xf32>
      tpu.vector_store %arg18[%c0_32, %c0_33], %53 {strides = array<i32>} : memref<16x32xf32, #tpu.memory_space<vmem>>, vector<16x32xf32>,
    } else {
    }
    %c1_i32_18 = arith.constant 1 : i32
    %26 = arith.cmpi eq, %arg0, %c1_i32_18 : i32
    %c1_i32_19 = arith.constant 1 : i32
    %27 = arith.cmpi eq, %arg1, %c1_i32_19 : i32
    %28 = arith.andi %26, %27 : i1
    %29 = arith.extui %28 : i1 to i32
    %c0_i32_20 = arith.constant 0 : i32
    %30 = arith.cmpi ne, %29, %c0_i32_20 : i32
    scf.if %30 {
      %c0_21 = arith.constant 0 : index
      %c0_22 = arith.constant 0 : index
      %31 = vector.load %arg6[%c0_21, %c0_22] : memref<2x16xbf16, #tpu.memory_space<vmem>>, vector<2x16xbf16>
      %c0_23 = arith.constant 0 : index
      %c0_24 = arith.constant 0 : index
      %32 = vector.load %arg18[%c0_23, %c0_24] : memref<16x32xf32, #tpu.memory_space<vmem>>, vector<16x32xf32>
      %33 = arith.truncf %32 : vector<16x32xf32> to vector<16x32xbf16>
      %cst_25 = arith.constant dense<0.000000e+00> : vector<2x32xf32>
      %34 = tpu.matmul %31, %33, %cst_25 {dimension_numbers = #tpu.dot_dimension_numbers<[1], [0], [0], [1], [0, 0, 1, 1], [], []>} : vector<2x16xbf16>, vector<16x32xbf16>, vector<2x32xf32> -> vector<2x32xf32>
      %c0_26 = arith.constant 0 : index
      %c0_27 = arith.constant 0 : index
      %35 = vector.load %arg7[%c0_26, %c0_27] : memref<2x1xf32, #tpu.memory_space<vmem>>, vector<2x1xf32>
      %36 = vector.broadcast %35 : vector<2x1xf32> to vector<2x32xf32>
      %37 = arith.mulf %34, %36 : vector<2x32xf32>
      %38 = arith.truncf %37 : vector<2x32xf32> to vector<2x32xbf16>
      %c0_28 = arith.constant 0 : index
      %c0_29 = arith.constant 0 : index
      %39 = vector.load %arg11[%c0_28, %c0_29] : memref<40x32xbf16, #tpu.memory_space<vmem>>, vector<32x32xbf16>
      %cst_30 = arith.constant dense<0.000000e+00> : vector<2x32xf32>
      %40 = tpu.matmul %38, %39, %cst_30 {dimension_numbers = #tpu.dot_dimension_numbers<[1], [0], [0], [1], [0, 0, 1, 1], [], []>} : vector<2x32xbf16>, vector<32x32xbf16>, vector<2x32xf32> -> vector<2x32xf32>
      %c0_31 = arith.constant 0 : index
      %c0_32 = arith.constant 0 : index
      %41 = vector.load %arg8[%c0_31, %c0_32] : memref<2x8xf32, #tpu.memory_space<vmem>>, vector<2x8xf32>
      %42 = arith.truncf %41 : vector<2x8xf32> to vector<2x8xbf16>
      %c32 = arith.constant 32 : index
      %c0_33 = arith.constant 0 : index
      %43 = vector.load %arg11[%c32, %c0_33] : memref<40x32xbf16, #tpu.memory_space<vmem>>, vector<8x32xbf16>
      %cst_34 = arith.constant dense<0.000000e+00> : vector<2x32xf32>
      %44 = tpu.matmul %42, %43, %cst_34 {dimension_numbers = #tpu.dot_dimension_numbers<[1], [0], [0], [1], [0, 0, 1, 1], [], []>} : vector<2x8xbf16>, vector<8x32xbf16>, vector<2x32xf32> -> vector<2x32xf32>
      %45 = arith.addf %40, %44 : vector<2x32xf32>
      %c0_35 = arith.constant 0 : index
      %c0_36 = arith.constant 0 : index
      %46 = vector.load %arg12[%c0_35, %c0_36] : memref<1x32xf32, #tpu.memory_space<vmem>>, vector<1x32xf32>
      %47 = vector.broadcast %46 : vector<1x32xf32> to vector<2x32xf32>
      %48 = arith.addf %45, %47 : vector<2x32xf32>
      %cst_37 = arith.constant 0.000000e+00 : f32
      %49 = vector.broadcast %cst_37 : f32 to vector<2x32xf32>
      %50 = arith.maximumf %48, %49 : vector<2x32xf32>
      %51 = arith.truncf %50 : vector<2x32xf32> to vector<2x32xbf16>
      %c0_38 = arith.constant 0 : index
      %c0_39 = arith.constant 0 : index
      %52 = vector.load %arg13[%c0_38, %c0_39] : memref<32x16xbf16, #tpu.memory_space<vmem>>, vector<32x16xbf16>
      %cst_40 = arith.constant dense<0.000000e+00> : vector<2x16xf32>
      %53 = tpu.matmul %51, %52, %cst_40 {dimension_numbers = #tpu.dot_dimension_numbers<[1], [0], [0], [1], [0, 0, 1, 1], [], []>} : vector<2x32xbf16>, vector<32x16xbf16>, vector<2x16xf32> -> vector<2x16xf32>
      %c0_41 = arith.constant 0 : index
      %c0_42 = arith.constant 0 : index
      %54 = vector.load %arg14[%c0_41, %c0_42] : memref<1x16xf32, #tpu.memory_space<vmem>>, vector<1x16xf32>
      %55 = vector.broadcast %54 : vector<1x16xf32> to vector<2x16xf32>
      %56 = arith.addf %53, %55 : vector<2x16xf32>
      %cst_43 = arith.constant 0.000000e+00 : f32
      %57 = vector.broadcast %cst_43 : f32 to vector<2x16xf32>
      %58 = arith.maximumf %56, %57 : vector<2x16xf32>
      %59 = arith.truncf %58 : vector<2x16xf32> to vector<2x16xbf16>
      %c0_44 = arith.constant 0 : index
      %c0_45 = arith.constant 0 : index
      %60 = vector.load %arg15[%c0_44, %c0_45] : memref<16x128xbf16, #tpu.memory_space<vmem>>, vector<16x128xbf16>
      %cst_46 = arith.constant dense<0.000000e+00> : vector<2x128xf32>
      %61 = tpu.matmul %59, %60, %cst_46 {dimension_numbers = #tpu.dot_dimension_numbers<[1], [0], [0], [1], [0, 0, 1, 1], [], []>} : vector<2x16xbf16>, vector<16x128xbf16>, vector<2x128xf32> -> vector<2x128xf32>
      %c0_47 = arith.constant 0 : index
      %c0_48 = arith.constant 0 : index
      %62 = vector.load %arg16[%c0_47, %c0_48] : memref<1x128xf32, #tpu.memory_space<vmem>>, vector<1x128xf32>
      %63 = vector.broadcast %62 : vector<1x128xf32> to vector<2x128xf32>
      %64 = arith.addf %61, %63 : vector<2x128xf32>
      %c0_49 = arith.constant 0 : index
      %c0_50 = arith.constant 0 : index
      %65 = vector.load %arg17[%c0_49, %c0_50] : memref<2x128xf32, #tpu.memory_space<vmem>>, vector<2x128xf32>
      tpu.vector_store %arg17[%c0_49, %c0_50], %64 {strides = array<i32>} : memref<2x128xf32, #tpu.memory_space<vmem>>, vector<2x128xf32>,
    } else {
    }
    return
  }
  func.func @transform_0(%arg0: i32, %arg1: i32) -> (i32, i32) {
    %c0_i32 = arith.constant 0 : i32
    %c0_i32_0 = arith.constant 0 : i32
    %c0_i32_1 = arith.constant 0 : i32
    return %c0_i32, %c0_i32_0 : i32, i32
  }
  func.func @transform_1(%arg0: i32, %arg1: i32) -> (i32, i32) {
    %c0_i32 = arith.constant 0 : i32
    %c0_i32_0 = arith.constant 0 : i32
    return %arg1, %c0_i32 : i32, i32
  }
  func.func @transform_2(%arg0: i32, %arg1: i32) -> (i32, i32) {
    %c0_i32 = arith.constant 0 : i32
    %c0_i32_0 = arith.constant 0 : i32
    return %arg1, %c0_i32 : i32, i32
  }
  func.func @transform_3(%arg0: i32, %arg1: i32) -> (i32, i32) {
    %c0_i32 = arith.constant 0 : i32
    %c0_i32_0 = arith.constant 0 : i32
    return %arg1, %c0_i32 : i32, i32
  }
  func.func @transform_4(%arg0: i32, %arg1: i32) -> (i32, i32) {
    %c0_i32 = arith.constant 0 : i32
    %c0_i32_0 = arith.constant 0 : i32
    %c0_i32_1 = arith.constant 0 : i32
    return %c0_i32, %c0_i32_0 : i32, i32
  }
  func.func @transform_5(%arg0: i32, %arg1: i32) -> (i32, i32) {
    %c0_i32 = arith.constant 0 : i32
    %c0_i32_0 = arith.constant 0 : i32
    %c0_i32_1 = arith.constant 0 : i32
    return %c0_i32, %c0_i32_0 : i32, i32
  }
  func.func @transform_6(%arg0: i32, %arg1: i32) -> (i32, i32) {
    %c0_i32 = arith.constant 0 : i32
    %c0_i32_0 = arith.constant 0 : i32
    %c0_i32_1 = arith.constant 0 : i32
    return %c0_i32, %c0_i32_0 : i32, i32
  }
  func.func @transform_7(%arg0: i32, %arg1: i32) -> (i32, i32, i32) {
    %c0_i32 = arith.constant 0 : i32
    %c0_i32_0 = arith.constant 0 : i32
    %c0_i32_1 = arith.constant 0 : i32
    %c0_i32_2 = arith.constant 0 : i32
    return %c0_i32, %c0_i32_0, %c0_i32_1 : i32, i32, i32
  }
  func.func @transform_8(%arg0: i32, %arg1: i32) -> (i32, i32, i32) {
    %c0_i32 = arith.constant 0 : i32
    %c0_i32_0 = arith.constant 0 : i32
    %c0_i32_1 = arith.constant 0 : i32
    %c0_i32_2 = arith.constant 0 : i32
    return %c0_i32, %c0_i32_0, %c0_i32_1 : i32, i32, i32
  }
  func.func @transform_9(%arg0: i32, %arg1: i32) -> (i32, i32) {
    %c0_i32 = arith.constant 0 : i32
    %c0_i32_0 = arith.constant 0 : i32
    %c0_i32_1 = arith.constant 0 : i32
    return %c0_i32, %c0_i32_0 : i32, i32
  }
  func.func @transform_10(%arg0: i32, %arg1: i32) -> (i32, i32) {
    %c0_i32 = arith.constant 0 : i32
    %c0_i32_0 = arith.constant 0 : i32
    %c0_i32_1 = arith.constant 0 : i32
    return %c0_i32, %c0_i32_0 : i32, i32
  }
  func.func @transform_11(%arg0: i32, %arg1: i32) -> (i32, i32) {
    %c0_i32 = arith.constant 0 : i32
    %c0_i32_0 = arith.constant 0 : i32
    %c0_i32_1 = arith.constant 0 : i32
    return %c0_i32, %c0_i32_0 : i32, i32
  }
  func.func @transform_12(%arg0: i32, %arg1: i32) -> (i32, i32) {
    %c0_i32 = arith.constant 0 : i32
    %c0_i32_0 = arith.constant 0 : i32
    %c0_i32_1 = arith.constant 0 : i32
    return %c0_i32, %c0_i32_0 : i32, i32
  }
  func.func @transform_13(%arg0: i32, %arg1: i32) -> (i32, i32) {
    %c0_i32 = arith.constant 0 : i32
    %c0_i32_0 = arith.constant 0 : i32
    %c0_i32_1 = arith.constant 0 : i32
    return %c0_i32, %c0_i32_0 : i32, i32
  }
  func.func @transform_14(%arg0: i32, %arg1: i32) -> (i32, i32) {
    %c0_i32 = arith.constant 0 : i32
    %c0_i32_0 = arith.constant 0 : i32
    %c0_i32_1 = arith.constant 0 : i32
    return %c0_i32, %c0_i32_0 : i32, i32
  }
  func.func @transform_15(%arg0: i32, %arg1: i32) -> (i32, i32) {
    %c0_i32 = arith.constant 0 : i32
    %c0_i32_0 = arith.constant 0 : i32
    %c0_i32_1 = arith.constant 0 : i32
    return %c0_i32, %c0_i32_0 : i32, i32
  }
}

</mosaic_0001>

<llo_original>
// kernel: tpu_custom_call.1
$region0: #{tpu_custom_call.1}
  #allocation0 [shape = 'u32[]', space=smem, size = 0x4, offset = 0x4, fixed_abs, tag = 'smem constant byte address 0x4 - core index']
  #allocation1 [shape = 'u32[144,128]{1,0:T(1,128)}', space=vmem, size = 0x12000, scoped, tag = 'internal scratch']
  #allocation2 [shape = 'f32[16,32]{1,0:T(8,128)}', space=vmem, size = 0x2000, scoped, tag = 'scratch operand']
  #allocation3 [shape = 'f32[16,32]{1,0:T(8,128)}', space=vmem, size = 0x2000, scoped, tag = 'scratch operand']
  %s0 = inlined_call_operand.vmem [shape: f32[16,32], index: 0, kind: input, shape index: {}]
  %s1 = inlined_call_operand.vmem [shape: bf16[32,32], index: 1, kind: input, shape index: {}]
  %s2 = inlined_call_operand.vmem [shape: bf16[32,16], index: 2, kind: input, shape index: {}]
  %s3 = inlined_call_operand.vmem [shape: bf16[32,16], index: 3, kind: input, shape index: {}]
  %s4 = inlined_call_operand.vmem [shape: bf16[2,16], index: 4, kind: input, shape index: {}]
  %s5 = inlined_call_operand.vmem [shape: f32[2,1], index: 5, kind: input, shape index: {}]
  %s6 = inlined_call_operand.vmem [shape: f32[2,8], index: 6, kind: input, shape index: {}]
  %s7 = inlined_call_operand.vmem [shape: bf16[2,64,32], index: 7, kind: input, shape index: {}]
  %s8 = inlined_call_operand.vmem [shape: f32[2,2,32], index: 8, kind: input, shape index: {}]
  %s9 = inlined_call_operand.vmem [shape: bf16[40,32], index: 9, kind: input, shape index: {}]
  %s10 = inlined_call_operand.vmem [shape: f32[1,32], index: 10, kind: input, shape index: {}]
  %s11 = inlined_call_operand.vmem [shape: bf16[32,16], index: 11, kind: input, shape index: {}]
  %s12 = inlined_call_operand.vmem [shape: f32[1,16], index: 12, kind: input, shape index: {}]
  %s13 = inlined_call_operand.vmem [shape: bf16[16,128], index: 13, kind: input, shape index: {}]
  %s14 = inlined_call_operand.vmem [shape: f32[1,128], index: 14, kind: input, shape index: {}]
  %s15 = inlined_call_operand.hbm [shape: f32[2,128], index: 15, kind: output, shape index: {}]
  %s16 = sld [smem:[#allocation0]]
  $region109: #{tpu_custom_call.1} parent=0
    _
  %s18 = ssub.s32 1, %s16
  %s19 = scalar_select 0, %s18, %s16
  $region1: #{tpu_custom_call.1} parent=0
    #allocation4 [shape = 'u8[1024]{0}', space=vmem, size = 0x400, scoped, tag = 'output window, operand 0, single buffered']
    #allocation5 [shape = 's32[2]{0}', space=sflag, size = 0x8, scoped, tag = 'scoped memory for tpu_custom_call.1']
    %20 = vsyncpa [#allocation5], 0
    loop: start=0, step=1, limit=6
    $region2: #{tpu_custom_call.1} parent=1 // loop_pre_header
      _
    $region3: #{tpu_custom_call.1} parent=1 // loop_header
      %s22 = sphi 0, %s26
      %p23 = scmp.ge.s32.totalorder %s22, 6
      %s29 = sphi 0, %s41
      %s30 = sphi 0, %s37
      %s31 = sphi 0, %s29
      %s32 = sphi 0, %s30
      %s33 = sphi 0, %s31
      %s34 = sphi 0, %s32
      %s42 = sphi 0, %s42
      %s44 = sphi 0, %s42
      %s45 = sphi 0, %s44
      %s59 = sphi 0, %s45
      %s65 = sphi 0, %s67
      %s68 = sphi 0, %s65
      %s69 = sphi 0, %s68
      %s85 = sphi 0, %s69
      %s91 = sphi 0, %s93
      %s94 = sphi 0, %s91
      %s95 = sphi 0, %s94
      %s111 = sphi 0, %s95
      %s117 = sphi 0, %s119
      %s120 = sphi 0, %s117
      %s121 = sphi 0, %s120
      %s137 = sphi 0, %s121
      %s141 = sphi 0, %s141
      %s143 = sphi 0, %s141
      %s144 = sphi 0, %s143
      %s158 = sphi 0, %s144
      %s162 = sphi 0, %s162
      %s164 = sphi 0, %s162
      %s165 = sphi 0, %s164
      %s179 = sphi 0, %s165
      %s183 = sphi 0, %s183
      %s185 = sphi 0, %s183
      %s186 = sphi 0, %s185
      %s200 = sphi 0, %s186
      %s204 = sphi 0, %s204
      %s206 = sphi 0, %s204
      %s207 = sphi 0, %s206
      %s221 = sphi 0, %s207
      %s225 = sphi 0, %s225
      %s227 = sphi 0, %s225
      %s228 = sphi 0, %s227
      %s242 = sphi 0, %s228
      %s246 = sphi 0, %s246
      %s248 = sphi 0, %s246
      %s249 = sphi 0, %s248
      %s263 = sphi 0, %s249
      %s267 = sphi 0, %s267
      %s269 = sphi 0, %s267
      %s270 = sphi 0, %s269
      %s284 = sphi 0, %s270
      %s288 = sphi 0, %s288
      %s290 = sphi 0, %s288
      %s291 = sphi 0, %s290
      %s305 = sphi 0, %s291
      %s309 = sphi 0, %s309
      %s311 = sphi 0, %s309
      %s312 = sphi 0, %s311
      %s326 = sphi 0, %s312
      %s330 = sphi 0, %s330
      %s332 = sphi 0, %s330
      %s333 = sphi 0, %s332
      %s347 = sphi 0, %s333
      %s351 = sphi 0, %s351
      %s353 = sphi 0, %s351
      %s354 = sphi 0, %s353
      %s368 = sphi 0, %s354
      %s372 = sphi 0, %s372
      %s374 = sphi 0, %s372
      %s375 = sphi 0, %s374
      %s389 = sphi 0, %s375
    $region4: #{tpu_custom_call.1} parent=1 // loop_header_branch
      %25 = sbr.rel (%p23) target = $region8
    $region5: #{tpu_custom_call.1} parent=1 // loop_body
      %s27 = ssub.s32 %s22, 1
      %s28 = ssub.s32 %s22, 2
      %s35 = sadd.s32 1, %s30
      %p36 = scmp.ge.s32.totalorder %s35, 2
      %s37 = scalar_select %p36, 0, %s35
      %s38 = sadd.s32 1, %s29
      %s39 = scalar_select %p36, %s38, %s29
      %p40 = scmp.ge.s32.totalorder %s39, 2
      %s41 = scalar_select %p40, 0, %s39
      %s43 = sadd.s32 %s42, 1
      %p46 = scmp.eq.s32.totalorder %s22, 3
      %p47 = scmp.ne.s32.totalorder %s42, %s44
      %p48 = scmp.eq.s32.totalorder %s22, 0
      %p49 = por %p47, %p48
      %p50 = scmp.ne.s32.totalorder %s42, %s44
      %p51 = scmp.eq.s32.totalorder %s27, 3
      %p52 = por %p50, %p51
      %p53 = scmp.ne.s32.totalorder %s44, %s45
      %p54 = scmp.eq.s32.totalorder %s27, 0
      %p55 = por %p53, %p54
      %p56 = scmp.ne.s32.totalorder %s44, %s45
      %p57 = scmp.eq.s32.totalorder %s28, 3
      %p58 = por %p56, %p57
      %p60 = scmp.ne.s32.totalorder %s45, %s59
      %p61 = scmp.eq.s32.totalorder %s28, 0
      %p62 = por %p60, %p61
      %s63 = ssub.s32 %s30, %s37
      %p64 = scmp.eq.s32.totalorder %s63, 0
      %s66 = sadd.s32 %s65, 1
      %s67 = scalar_select %p64, %s65, %s66
      %p70 = pneg %p64
      %p71 = scmp.eq.s32.totalorder %s22, 3
      %p72 = por %p70, %p71
      %p73 = scmp.ne.s32.totalorder %s65, %s68
      %p74 = scmp.eq.s32.totalorder %s22, 0
      %p75 = por %p73, %p74
      %p76 = scmp.ne.s32.totalorder %s65, %s68
      %p77 = scmp.eq.s32.totalorder %s27, 3
      %p78 = por %p76, %p77
      %p79 = scmp.ne.s32.totalorder %s68, %s69
      %p80 = scmp.eq.s32.totalorder %s27, 0
      %p81 = por %p79, %p80
      %p82 = scmp.ne.s32.totalorder %s68, %s69
      %p83 = scmp.eq.s32.totalorder %s28, 3
      %p84 = por %p82, %p83
      %p86 = scmp.ne.s32.totalorder %s69, %s85
      %p87 = scmp.eq.s32.totalorder %s28, 0
      %p88 = por %p86, %p87
      %s89 = ssub.s32 %s30, %s37
      %p90 = scmp.eq.s32.totalorder %s89, 0
      %s92 = sadd.s32 %s91, 1
      %s93 = scalar_select %p90, %s91, %s92
      %p96 = pneg %p90
      %p97 = scmp.eq.s32.totalorder %s22, 3
      %p98 = por %p96, %p97
      %p99 = scmp.ne.s32.totalorder %s91, %s94
      %p100 = scmp.eq.s32.totalorder %s22, 0
      %p101 = por %p99, %p100
      %p102 = scmp.ne.s32.totalorder %s91, %s94
      %p103 = scmp.eq.s32.totalorder %s27, 3
      %p104 = por %p102, %p103
      %p105 = scmp.ne.s32.totalorder %s94, %s95
      %p106 = scmp.eq.s32.totalorder %s27, 0
      %p107 = por %p105, %p106
      %p108 = scmp.ne.s32.totalorder %s94, %s95
      %p109 = scmp.eq.s32.totalorder %s28, 3
      %p110 = por %p108, %p109
      %p112 = scmp.ne.s32.totalorder %s95, %s111
      %p113 = scmp.eq.s32.totalorder %s28, 0
      %p114 = por %p112, %p113
      %s115 = ssub.s32 %s30, %s37
      %p116 = scmp.eq.s32.totalorder %s115, 0
      %s118 = sadd.s32 %s117, 1
      %s119 = scalar_select %p116, %s117, %s118
      %p122 = pneg %p116
      %p123 = scmp.eq.s32.totalorder %s22, 3
      %p124 = por %p122, %p123
      %p125 = scmp.ne.s32.totalorder %s117, %s120
      %p126 = scmp.eq.s32.totalorder %s22, 0
      %p127 = por %p125, %p126
      %p128 = scmp.ne.s32.totalorder %s117, %s120
      %p129 = scmp.eq.s32.totalorder %s27, 3
      %p130 = por %p128, %p129
      %p131 = scmp.ne.s32.totalorder %s120, %s121
      %p132 = scmp.eq.s32.totalorder %s27, 0
      %p133 = por %p131, %p132
      %p134 = scmp.ne.s32.totalorder %s120, %s121
      %p135 = scmp.eq.s32.totalorder %s28, 3
      %p136 = por %p134, %p135
      %p138 = scmp.ne.s32.totalorder %s121, %s137
      %p139 = scmp.eq.s32.totalorder %s28, 0
      %p140 = por %p138, %p139
      %s142 = sadd.s32 %s141, 1
      %p145 = scmp.eq.s32.totalorder %s22, 3
      %p146 = scmp.ne.s32.totalorder %s141, %s143
      %p147 = scmp.eq.s32.totalorder %s22, 0
      %p148 = por %p146, %p147
      %p149 = scmp.ne.s32.totalorder %s141, %s143
      %p150 = scmp.eq.s32.totalorder %s27, 3
      %p151 = por %p149, %p150
      %p152 = scmp.ne.s32.totalorder %s143, %s144
      %p153 = scmp.eq.s32.totalorder %s27, 0
      %p154 = por %p152, %p153
      %p155 = scmp.ne.s32.totalorder %s143, %s144
      %p156 = scmp.eq.s32.totalorder %s28, 3
      %p157 = por %p155, %p156
      %p159 = scmp.ne.s32.totalorder %s144, %s158
      %p160 = scmp.eq.s32.totalorder %s28, 0
      %p161 = por %p159, %p160
      %s163 = sadd.s32 %s162, 1
      %p166 = scmp.eq.s32.totalorder %s22, 3
      %p167 = scmp.ne.s32.totalorder %s162, %s164
      %p168 = scmp.eq.s32.totalorder %s22, 0
      %p169 = por %p167, %p168
      %p170 = scmp.ne.s32.totalorder %s162, %s164
      %p171 = scmp.eq.s32.totalorder %s27, 3
      %p172 = por %p170, %p171
      %p173 = scmp.ne.s32.totalorder %s164, %s165
      %p174 = scmp.eq.s32.totalorder %s27, 0
      %p175 = por %p173, %p174
      %p176 = scmp.ne.s32.totalorder %s164, %s165
      %p177 = scmp.eq.s32.totalorder %s28, 3
      %p178 = por %p176, %p177
      %p180 = scmp.ne.s32.totalorder %s165, %s179
      %p181 = scmp.eq.s32.totalorder %s28, 0
      %p182 = por %p180, %p181
      %s184 = sadd.s32 %s183, 1
      %p187 = scmp.eq.s32.totalorder %s22, 3
      %p188 = scmp.ne.s32.totalorder %s183, %s185
      %p189 = scmp.eq.s32.totalorder %s22, 0
      %p190 = por %p188, %p189
      %p191 = scmp.ne.s32.totalorder %s183, %s185
      %p192 = scmp.eq.s32.totalorder %s27, 3
      %p193 = por %p191, %p192
      %p194 = scmp.ne.s32.totalorder %s185, %s186
      %p195 = scmp.eq.s32.totalorder %s27, 0
      %p196 = por %p194, %p195
      %p197 = scmp.ne.s32.totalorder %s185, %s186
      %p198 = scmp.eq.s32.totalorder %s28, 3
      %p199 = por %p197, %p198
      %p201 = scmp.ne.s32.totalorder %s186, %s200
      %p202 = scmp.eq.s32.totalorder %s28, 0
      %p203 = por %p201, %p202
      %s205 = sadd.s32 %s204, 1
      %p208 = scmp.eq.s32.totalorder %s22, 3
      %p209 = scmp.ne.s32.totalorder %s204, %s206
      %p210 = scmp.eq.s32.totalorder %s22, 0
      %p211 = por %p209, %p210
      %p212 = scmp.ne.s32.totalorder %s204, %s206
      %p213 = scmp.eq.s32.totalorder %s27, 3
      %p214 = por %p212, %p213
      %p215 = scmp.ne.s32.totalorder %s206, %s207
      %p216 = scmp.eq.s32.totalorder %s27, 0
      %p217 = por %p215, %p216
      %p218 = scmp.ne.s32.totalorder %s206, %s207
      %p219 = scmp.eq.s32.totalorder %s28, 3
      %p220 = por %p218, %p219
      %p222 = scmp.ne.s32.totalorder %s207, %s221
      %p223 = scmp.eq.s32.totalorder %s28, 0
      %p224 = por %p222, %p223
      %s226 = sadd.s32 %s225, 1
      %p229 = scmp.eq.s32.totalorder %s22, 3
      %p230 = scmp.ne.s32.totalorder %s225, %s227
      %p231 = scmp.eq.s32.totalorder %s22, 0
      %p232 = por %p230, %p231
      %p233 = scmp.ne.s32.totalorder %s225, %s227
      %p234 = scmp.eq.s32.totalorder %s27, 3
      %p235 = por %p233, %p234
      %p236 = scmp.ne.s32.totalorder %s227, %s228
      %p237 = scmp.eq.s32.totalorder %s27, 0
      %p238 = por %p236, %p237
      %p239 = scmp.ne.s32.totalorder %s227, %s228
      %p240 = scmp.eq.s32.totalorder %s28, 3
      %p241 = por %p239, %p240
      %p243 = scmp.ne.s32.totalorder %s228, %s242
      %p244 = scmp.eq.s32.totalorder %s28, 0
      %p245 = por %p243, %p244
      %s247 = sadd.s32 %s246, 1
      %p250 = scmp.eq.s32.totalorder %s22, 3
      %p251 = scmp.ne.s32.totalorder %s246, %s248
      %p252 = scmp.eq.s32.totalorder %s22, 0
      %p253 = por %p251, %p252
      %p254 = scmp.ne.s32.totalorder %s246, %s248
      %p255 = scmp.eq.s32.totalorder %s27, 3
      %p256 = por %p254, %p255
      %p257 = scmp.ne.s32.totalorder %s248, %s249
      %p258 = scmp.eq.s32.totalorder %s27, 0
      %p259 = por %p257, %p258
      %p260 = scmp.ne.s32.totalorder %s248, %s249
      %p261 = scmp.eq.s32.totalorder %s28, 3
      %p262 = por %p260, %p261
      %p264 = scmp.ne.s32.totalorder %s249, %s263
      %p265 = scmp.eq.s32.totalorder %s28, 0
      %p266 = por %p264, %p265
      %s268 = sadd.s32 %s267, 1
      %p271 = scmp.eq.s32.totalorder %s22, 3
      %p272 = scmp.ne.s32.totalorder %s267, %s269
      %p273 = scmp.eq.s32.totalorder %s22, 0
      %p274 = por %p272, %p273
      %p275 = scmp.ne.s32.totalorder %s267, %s269
      %p276 = scmp.eq.s32.totalorder %s27, 3
      %p277 = por %p275, %p276
      %p278 = scmp.ne.s32.totalorder %s269, %s270
      %p279 = scmp.eq.s32.totalorder %s27, 0
      %p280 = por %p278, %p279
      %p281 = scmp.ne.s32.totalorder %s269, %s270
      %p282 = scmp.eq.s32.totalorder %s28, 3
      %p283 = por %p281, %p282
      %p285 = scmp.ne.s32.totalorder %s270, %s284
      %p286 = scmp.eq.s32.totalorder %s28, 0
      %p287 = por %p285, %p286
      %s289 = sadd.s32 %s288, 1
      %p292 = scmp.eq.s32.totalorder %s22, 3
      %p293 = scmp.ne.s32.totalorder %s288, %s290
      %p294 = scmp.eq.s32.totalorder %s22, 0
      %p295 = por %p293, %p294
      %p296 = scmp.ne.s32.totalorder %s288, %s290
      %p297 = scmp.eq.s32.totalorder %s27, 3
      %p298 = por %p296, %p297
      %p299 = scmp.ne.s32.totalorder %s290, %s291
      %p300 = scmp.eq.s32.totalorder %s27, 0
      %p301 = por %p299, %p300
      %p302 = scmp.ne.s32.totalorder %s290, %s291
      %p303 = scmp.eq.s32.totalorder %s28, 3
      %p304 = por %p302, %p303
      %p306 = scmp.ne.s32.totalorder %s291, %s305
      %p307 = scmp.eq.s32.totalorder %s28, 0
      %p308 = por %p306, %p307
      %s310 = sadd.s32 %s309, 1
      %p313 = scmp.eq.s32.totalorder %s22, 3
      %p314 = scmp.ne.s32.totalorder %s309, %s311
      %p315 = scmp.eq.s32.totalorder %s22, 0
      %p316 = por %p314, %p315
      %p317 = scmp.ne.s32.totalorder %s309, %s311
      %p318 = scmp.eq.s32.totalorder %s27, 3
      %p319 = por %p317, %p318
      %p320 = scmp.ne.s32.totalorder %s311, %s312
      %p321 = scmp.eq.s32.totalorder %s27, 0
      %p322 = por %p320, %p321
      %p323 = scmp.ne.s32.totalorder %s311, %s312
      %p324 = scmp.eq.s32.totalorder %s28, 3
      %p325 = por %p323, %p324
      %p327 = scmp.ne.s32.totalorder %s312, %s326
      %p328 = scmp.eq.s32.totalorder %s28, 0
      %p329 = por %p327, %p328
      %s331 = sadd.s32 %s330, 1
      %p334 = scmp.eq.s32.totalorder %s22, 3
      %p335 = scmp.ne.s32.totalorder %s330, %s332
      %p336 = scmp.eq.s32.totalorder %s22, 0
      %p337 = por %p335, %p336
      %p338 = scmp.ne.s32.totalorder %s330, %s332
      %p339 = scmp.eq.s32.totalorder %s27, 3
      %p340 = por %p338, %p339
      %p341 = scmp.ne.s32.totalorder %s332, %s333
      %p342 = scmp.eq.s32.totalorder %s27, 0
      %p343 = por %p341, %p342
      %p344 = scmp.ne.s32.totalorder %s332, %s333
      %p345 = scmp.eq.s32.totalorder %s28, 3
      %p346 = por %p344, %p345
      %p348 = scmp.ne.s32.totalorder %s333, %s347
      %p349 = scmp.eq.s32.totalorder %s28, 0
      %p350 = por %p348, %p349
      %s352 = sadd.s32 %s351, 1
      %p355 = scmp.eq.s32.totalorder %s22, 3
      %p356 = scmp.ne.s32.totalorder %s351, %s353
      %p357 = scmp.eq.s32.totalorder %s22, 0
      %p358 = por %p356, %p357
      %p359 = scmp.ne.s32.totalorder %s351, %s353
      %p360 = scmp.eq.s32.totalorder %s27, 3
      %p361 = por %p359, %p360
      %p362 = scmp.ne.s32.totalorder %s353, %s354
      %p363 = scmp.eq.s32.totalorder %s27, 0
      %p364 = por %p362, %p363
      %p365 = scmp.ne.s32.totalorder %s353, %s354
      %p366 = scmp.eq.s32.totalorder %s28, 3
      %p367 = por %p365, %p366
      %p369 = scmp.ne.s32.totalorder %s354, %s368
      %p370 = scmp.eq.s32.totalorder %s28, 0
      %p371 = por %p369, %p370
      %s373 = sadd.s32 %s372, 1
      %p376 = scmp.eq.s32.totalorder %s22, 3
      %p377 = scmp.ne.s32.totalorder %s372, %s374
      %p378 = scmp.eq.s32.totalorder %s22, 0
      %p379 = por %p377, %p378
      %p380 = scmp.ne.s32.totalorder %s372, %s374
      %p381 = scmp.eq.s32.totalorder %s27, 3
      %p382 = por %p380, %p381
      %p383 = scmp.ne.s32.totalorder %s374, %s375
      %p384 = scmp.eq.s32.totalorder %s27, 0
      %p385 = por %p383, %p384
      %p386 = scmp.ne.s32.totalorder %s374, %s375
      %p387 = scmp.eq.s32.totalorder %s28, 3
      %p388 = por %p386, %p387
      %p390 = scmp.ne.s32.totalorder %s375, %s389
      %p391 = scmp.eq.s32.totalorder %s28, 0
      %p392 = por %p390, %p391
      %p393 = scmp.le.s32.totalorder 1, %s22
      %p394 = scmp.lt.s32.totalorder %s22, 5
      %p395 = pnand %p393, %p394
      %p396 = pneg %p395
      // Predicated region
      $region9: #{tpu_custom_call.1} parent=5 // pred_check
        _
      $region10: #{tpu_custom_call.1} parent=5 // pred_check_branch
        %398 = sbr.rel (%p395) target = $region12
      $region11: #{tpu_custom_call.1} parent=5 // pred_region
        %s399 = ssub.s32 %s22, 1
        // Predicated region
        $region13: #{tpu_custom_call.1} parent=11 // pred_check
          %p400 = pneg %p55
        $region14: #{tpu_custom_call.1} parent=11 // pred_check_branch
          %402 = sbr.rel (%p400) target = $region16
        $region15: #{tpu_custom_call.1} parent=11 // pred_region
          _
        $region16: #{tpu_custom_call.1} parent=11 // pred_fallthru
          _
        // Predicated region
        $region17: #{tpu_custom_call.1} parent=11 // pred_check
          %p403 = pneg %p154
        $region18: #{tpu_custom_call.1} parent=11 // pred_check_branch
          %405 = sbr.rel (%p403) target = $region20
        $region19: #{tpu_custom_call.1} parent=11 // pred_region
          _
        $region20: #{tpu_custom_call.1} parent=11 // pred_fallthru
          _
        // Predicated region
        $region21: #{tpu_custom_call.1} parent=11 // pred_check
          %p406 = pneg %p175
        $region22: #{tpu_custom_call.1} parent=11 // pred_check_branch
          %408 = sbr.rel (%p406) target = $region24
        $region23: #{tpu_custom_call.1} parent=11 // pred_region
          _
        $region24: #{tpu_custom_call.1} parent=11 // pred_fallthru
          _
        // Predicated region
        $region25: #{tpu_custom_call.1} parent=11 // pred_check
          %p409 = pneg %p196
        $region26: #{tpu_custom_call.1} parent=11 // pred_check_branch
          %411 = sbr.rel (%p409) target = $region28
        $region27: #{tpu_custom_call.1} parent=11 // pred_region
          _
        $region28: #{tpu_custom_call.1} parent=11 // pred_fallthru
          _
        // Predicated region
        $region29: #{tpu_custom_call.1} parent=11 // pred_check
          %p412 = pneg %p217
        $region30: #{tpu_custom_call.1} parent=11 // pred_check_branch
          %414 = sbr.rel (%p412) target = $region32
        $region31: #{tpu_custom_call.1} parent=11 // pred_region
          _
        $region32: #{tpu_custom_call.1} parent=11 // pred_fallthru
          _
        // Predicated region
        $region33: #{tpu_custom_call.1} parent=11 // pred_check
          %p415 = pneg %p238
        $region34: #{tpu_custom_call.1} parent=11 // pred_check_branch
          %417 = sbr.rel (%p415) target = $region36
        $region35: #{tpu_custom_call.1} parent=11 // pred_region
          _
        $region36: #{tpu_custom_call.1} parent=11 // pred_fallthru
          _
        // Predicated region
        $region37: #{tpu_custom_call.1} parent=11 // pred_check
          %p418 = pneg %p259
        $region38: #{tpu_custom_call.1} parent=11 // pred_check_branch
          %420 = sbr.rel (%p418) target = $region40
        $region39: #{tpu_custom_call.1} parent=11 // pred_region
          _
        $region40: #{tpu_custom_call.1} parent=11 // pred_fallthru
          _
        // Predicated region
        $region41: #{tpu_custom_call.1} parent=11 // pred_check
          %p421 = pneg %p280
        $region42: #{tpu_custom_call.1} parent=11 // pred_check_branch
          %423 = sbr.rel (%p421) target = $region44
        $region43: #{tpu_custom_call.1} parent=11 // pred_region
          _
        $region44: #{tpu_custom_call.1} parent=11 // pred_fallthru
          _
        // Predicated region
        $region45: #{tpu_custom_call.1} parent=11 // pred_check
          %p424 = pneg %p301
        $region46: #{tpu_custom_call.1} parent=11 // pred_check_branch
          %426 = sbr.rel (%p424) target = $region48
        $region47: #{tpu_custom_call.1} parent=11 // pred_region
          _
        $region48: #{tpu_custom_call.1} parent=11 // pred_fallthru
          _
        // Predicated region
        $region49: #{tpu_custom_call.1} parent=11 // pred_check
          %p427 = pneg %p322
        $region50: #{tpu_custom_call.1} parent=11 // pred_check_branch
          %429 = sbr.rel (%p427) target = $region52
        $region51: #{tpu_custom_call.1} parent=11 // pred_region
          _
        $region52: #{tpu_custom_call.1} parent=11 // pred_fallthru
          _
        // Predicated region
        $region53: #{tpu_custom_call.1} parent=11 // pred_check
          %p430 = pneg %p343
        $region54: #{tpu_custom_call.1} parent=11 // pred_check_branch
          %432 = sbr.rel (%p430) target = $region56
        $region55: #{tpu_custom_call.1} parent=11 // pred_region
          _
        $region56: #{tpu_custom_call.1} parent=11 // pred_fallthru
          _
        // Predicated region
        $region57: #{tpu_custom_call.1} parent=11 // pred_check
          %p433 = pneg %p364
        $region58: #{tpu_custom_call.1} parent=11 // pred_check_branch
          %435 = sbr.rel (%p433) target = $region60
        $region59: #{tpu_custom_call.1} parent=11 // pred_region
          _
        $region60: #{tpu_custom_call.1} parent=11 // pred_fallthru
          _
      $region12: #{tpu_custom_call.1} parent=5 // pred_fallthru
        _
      %p436 = scmp.lt.s32.totalorder %s22, 4
      // Predicated region
      $region61: #{tpu_custom_call.1} parent=5 // pred_check
        %p437 = pneg %p436
      $region62: #{tpu_custom_call.1} parent=5 // pred_check_branch
        %439 = sbr.rel (%p437) target = $region64
      $region63: #{tpu_custom_call.1} parent=5 // pred_region
        // Predicated region
        $region65: #{tpu_custom_call.1} parent=63 // pred_check
          %p440 = pneg %p75
        $region66: #{tpu_custom_call.1} parent=63 // pred_check_branch
          %442 = sbr.rel (%p440) target = $region68
        $region67: #{tpu_custom_call.1} parent=63 // pred_region
          %s443 = smul.u32 2, %s30
          %p444 = scmp.lt.s32.totalorder %s443, 3
          %s445 = scalar_select %p444, %s443, 3
          %s446 = smul.addr %s445, 4
          %s447 = scalar_lea.vmem %s1, %s446
          %s448 = smul.u32 2, %s30
        $region68: #{tpu_custom_call.1} parent=63 // pred_fallthru
          _
        // Predicated region
        $region69: #{tpu_custom_call.1} parent=63 // pred_check
          %p449 = pneg %p101
        $region70: #{tpu_custom_call.1} parent=63 // pred_check_branch
          %451 = sbr.rel (%p449) target = $region72
        $region71: #{tpu_custom_call.1} parent=63 // pred_region
          %s452 = smul.u32 2, %s30
          %p453 = scmp.lt.s32.totalorder %s452, 3
          %s454 = scalar_select %p453, %s452, 3
          %s455 = smul.addr %s454, 4
          %s456 = scalar_lea.vmem %s2, %s455
          %s457 = smul.u32 2, %s30
        $region72: #{tpu_custom_call.1} parent=63 // pred_fallthru
          _
        // Predicated region
        $region73: #{tpu_custom_call.1} parent=63 // pred_check
          %p458 = pneg %p127
        $region74: #{tpu_custom_call.1} parent=63 // pred_check_branch
          %460 = sbr.rel (%p458) target = $region76
        $region75: #{tpu_custom_call.1} parent=63 // pred_region
          %s461 = smul.u32 2, %s30
          %p462 = scmp.lt.s32.totalorder %s461, 3
          %s463 = scalar_select %p462, %s461, 3
          %s464 = smul.addr %s463, 4
          %s465 = scalar_lea.vmem %s3, %s464
          %s466 = smul.u32 2, %s30
        $region76: #{tpu_custom_call.1} parent=63 // pred_fallthru
          _
      $region64: #{tpu_custom_call.1} parent=5 // pred_fallthru
        _
      %p467 = scmp.le.s32.totalorder 1, %s22
      %p468 = scmp.lt.s32.totalorder %s22, 5
      %p469 = pnand %p467, %p468
      %p470 = pneg %p469
      // Predicated region
      $region77: #{tpu_custom_call.1} parent=5 // pred_check
        _
      $region78: #{tpu_custom_call.1} parent=5 // pred_check_branch
        %472 = sbr.rel (%p469) target = $region80
      $region79: #{tpu_custom_call.1} parent=5 // pred_region
        %s473 = ssub.s32 %s22, 1
        %p474 = pneg %p55
        %p475 = pneg %p52
        %s476 = smul.u32 2, %s32
        %p477 = scmp.lt.s32.totalorder %s476, 3
        %s478 = scalar_select %p477, %s476, 3
        %s479 = smul.addr %s478, 4
        %s480 = scalar_lea.vmem %s1, %s479
        %p481 = pneg %p81
        %p482 = pneg %p78
        %s483 = smul.u32 2, %s32
        %p484 = scmp.lt.s32.totalorder %s483, 3
        %s485 = scalar_select %p484, %s483, 3
        %s486 = smul.addr %s485, 4
        %s487 = scalar_lea.vmem %s2, %s486
        %p488 = pneg %p107
        %p489 = pneg %p104
        %s490 = smul.u32 2, %s32
        %p491 = scmp.lt.s32.totalorder %s490, 3
        %s492 = scalar_select %p491, %s490, 3
        %s493 = smul.addr %s492, 4
        %s494 = scalar_lea.vmem %s3, %s493
        %p495 = pneg %p133
        %p496 = pneg %p130
        %p497 = pneg %p154
        %p498 = pneg %p151
        %p499 = pneg %p175
        %p500 = pneg %p172
        %p501 = pneg %p196
        %p502 = pneg %p193
        %p503 = pneg %p217
        %p504 = pneg %p214
        %p505 = pneg %p238
        %p506 = pneg %p235
        %p507 = pneg %p259
        %p508 = pneg %p256
        %p509 = pneg %p280
        %p510 = pneg %p277
        %p511 = pneg %p301
        %p512 = pneg %p298
        %p513 = pneg %p322
        %p514 = pneg %p319
        %p515 = pneg %p343
        %p516 = pneg %p340
        %p517 = pneg %p364
        %p518 = pneg %p361
        %p519 = pneg %p385
        %p520 = pneg %p382
        %s521 = smul.u32 2, %s32
        %p522 = scmp.lt.s32.totalorder %s521, 3
        %s523 = scalar_select %p522, %s521, 3
        %s524 = smul.addr %s523, 4
        %s525 = scalar_lea.vmem %s1, %s524
        %s526 = smul.u32 2, %s32
        %s527 = smul.u32 2, %s32
        %p528 = scmp.lt.s32.totalorder %s527, 3
        %s529 = scalar_select %p528, %s527, 3
        %s530 = smul.addr %s529, 4
        %s531 = scalar_lea.vmem %s2, %s530
        %s532 = smul.u32 2, %s32
        %s533 = smul.u32 2, %s32
        %p534 = scmp.lt.s32.totalorder %s533, 3
        %s535 = scalar_select %p534, %s533, 3
        %s536 = smul.addr %s535, 4
        %s537 = scalar_lea.vmem %s3, %s536
        %s538 = smul.u32 2, %s32
        %p540 = scmp.eq.s32.totalorder %s31, 0
        %p541 = scmp.eq.s32.totalorder %s32, 0
        %p542 = pnand %p540, %p541
        %p543 = pneg %p542
        // Predicated region
        $region81: #{tpu_custom_call.1} parent=79 // pred_check
          _
        $region82: #{tpu_custom_call.1} parent=79 // pred_check_branch
          %545 = sbr.rel (%p542) target = $region84
        $region83: #{tpu_custom_call.1} parent=79 // pred_region
          %v546 = vld [vmem:[%s0] sm:$0xff]
          %v547 = vld [vmem:[%s0 + $0x8] sm:$0xff]
          %vm548 = vcmask 261120
          %549 = vst.msk [vmem:[#allocation2] sm:$0xff] %vm548, %v546
          %550 = vst.msk [vmem:[#allocation2 + $0x8] sm:$0xff] %vm548, %v547
        $region84: #{tpu_custom_call.1} parent=79 // pred_fallthru
          _
        // Predicated region
        $region85: #{tpu_custom_call.1} parent=79 // pred_check
          %p551 = pneg %p541
        $region86: #{tpu_custom_call.1} parent=79 // pred_check_branch
          %553 = sbr.rel (%p551) target = $region88
        $region87: #{tpu_custom_call.1} parent=79 // pred_region
          %vm554 = vcmask 261120
          %555 = vst.msk [vmem:[#allocation3] sm:$0xff] %vm554, 0.0
          %556 = vst.msk [vmem:[#allocation3 + $0x8] sm:$0xff] %vm554, 0.0
        $region88: #{tpu_custom_call.1} parent=79 // pred_fallthru
          _
        %v557 = vld [vmem:[#allocation2] sm:$0xff]
        %v558 = vld [vmem:[#allocation2 + $0x8] sm:$0xff]
        %v559 = vpack.c.bf16 %v558, %v557
        %v560 = vld [vmem:[%s531] sm:$0xf]
        %v561 = vld [vmem:[%s531 + $0x4] sm:$0xf]
        %v562 = vld [vmem:[%s525] sm:$0xf]
        %v563 = vld [vmem:[%s525 + $0x4] sm:$0xf]
        %v564 = vunpack.c.l.bf16 %v562
        %v565 = vunpack.c.l.bf16 %v563
        %v568 = vunpack.c.l.b16 %v560
        %v569 = vunpack.c.l.b16 %v561
        %v570 = vpack.c.b16 %v569, %v568
        %vm571 = vcmask 130048
        %v573 = vsel %vm571, %v570, 0
        %575 = vmatprep.subr.bf16.mxu0 0
        %576 = vmatpush1.bf16.msra.mxu0 0
        %577 = vmatprep.subr.bf16.mxu0 0
        %578 = vmatpush1.bf16.msra.mxu0 0
        %579 = vmatprep.subr.bf16.mxu0 0
        %580 = vmatpush1.bf16.msra.mxu0 0
        %581 = vmatprep.subr.bf16.mxu0 0
        %582 = vmatpush1.bf16.msra.mxu0 0
        %583 = vmatprep.subr.bf16.mxu0 0
        %584 = vmatpush1.bf16.msra.mxu0 0
        %585 = vmatprep.subr.bf16.mxu0 0
        %586 = vmatpush1.bf16.msra.mxu0 0
        %587 = vmatprep.subr.bf16.mxu0 0
        %588 = vmatpush1.bf16.msra.mxu0 0
        %589 = vmatprep.subr.bf16.mxu0 0
        %590 = vmatpush1.bf16.msra.mxu0 %v559
        %591 = vmatprep.subr.bf16.mxu0 0
        %592 = vmatpush2.bf16.msra.mxu0 0
        %593 = vmatprep.subr.bf16.mxu0 0
        %594 = vmatpush2.bf16.msra.mxu0 0
        %595 = vmatprep.subr.bf16.mxu0 0
        %596 = vmatpush2.bf16.msra.mxu0 0
        %597 = vmatprep.subr.bf16.mxu0 0
        %598 = vmatpush2.bf16.msra.mxu0 0
        %599 = vmatprep.subr.bf16.mxu0 0
        %600 = vmatpush2.bf16.msra.mxu0 0
        %601 = vmatprep.subr.bf16.mxu0 0
        %602 = vmatpush2.bf16.msra.mxu0 0
        %603 = vmatprep.subr.bf16.mxu0 0
        %604 = vmatpush2.bf16.msra.mxu0 0
        %605 = vmatprep.subr.bf16.mxu0 0
        %606 = vmatpush2.bf16.msra.mxu0 0
        %607 = vmatprep.mubr.bf16.mxu0 0
        %608 = vmatmul.mubr.bf16.gmra.mxu0 %v573
        %v609 = vpop.f32.mrf.mxu0
        %v610 = vadd.f32 %v564, %v609
        %v611 = vpop.f32.mrf.mxu0
        %v612 = vpop.f32.mrf.mxu0
        %v613 = vadd.f32 %v565, %v612
        %v614 = vpop.f32.mrf.mxu0
        %615 = vdwg.mxu0
        %v616 = vmax.f32 %v610, 0.0
        %v617 = vmax.f32 %v613, 0.0
        %v618 = vld [vmem:[#allocation3] sm:$0xff]
        %v619 = vld [vmem:[#allocation3 + $0x8] sm:$0xff]
        %v620 = vld [vmem:[%s537] sm:$0xf]
        %v621 = vld [vmem:[%s537 + $0x4] sm:$0xf]
        %v622 = vpack.c.bf16 %v617, %v616
        %v625 = vunpack.c.l.b16 %v620
        %v626 = vunpack.c.l.b16 %v621
        %v627 = vpack.c.b16 %v626, %v625
        %629 = vxpose.xlu0.c.b16.start [1/8] %v627, 128
        %630 = vxpose.xlu0.c.b16.cont [2/8] 0, 128
        %631 = vxpose.xlu0.c.b16.cont [3/8] 0, 128
        %632 = vxpose.xlu0.c.b16.cont [4/8] 0, 128
        %633 = vxpose.xlu0.c.b16.cont [5/8] 0, 128
        %634 = vxpose.xlu0.c.b16.cont [6/8] 0, 128
        %635 = vxpose.xlu0.c.b16.cont [7/8] 0, 128
        %636 = vxpose.xlu0.c.b16.end [8/8] 0, 128
        %v637 = vpop.trf.xlu0
        %v638 = vpop.trf.xlu0
        %v639 = vpop.trf.xlu0
        %v640 = vpop.trf.xlu0
        %v641 = vpop.trf.xlu0
        %v642 = vpop.trf.xlu0
        %v643 = vpop.trf.xlu0
        %v644 = vpop.trf.xlu0
        %v646 = vsel %vm571, %v637, 0
        %648 = vmatprep.subr.bf16.mxu0 0
        %649 = vmatpush1.bf16.msra.mxu0 0
        %650 = vmatprep.subr.bf16.mxu0 0
        %651 = vmatpush1.bf16.msra.mxu0 0
        %652 = vmatprep.subr.bf16.mxu0 0
        %653 = vmatpush1.bf16.msra.mxu0 0
        %654 = vmatprep.subr.bf16.mxu0 0
        %655 = vmatpush1.bf16.msra.mxu0 0
        %656 = vmatprep.subr.bf16.mxu0 0
        %657 = vmatpush1.bf16.msra.mxu0 0
        %658 = vmatprep.subr.bf16.mxu0 0
        %659 = vmatpush1.bf16.msra.mxu0 0
        %660 = vmatprep.subr.bf16.mxu0 0
        %661 = vmatpush1.bf16.msra.mxu0 0
        %662 = vmatprep.subr.bf16.mxu0 0
        %663 = vmatpush1.bf16.msra.mxu0 %v622
        %664 = vmatprep.subr.bf16.mxu0 0
        %665 = vmatpush2.bf16.msra.mxu0 0
        %666 = vmatprep.subr.bf16.mxu0 0
        %667 = vmatpush2.bf16.msra.mxu0 0
        %668 = vmatprep.subr.bf16.mxu0 0
        %669 = vmatpush2.bf16.msra.mxu0 0
        %670 = vmatprep.subr.bf16.mxu0 0
        %671 = vmatpush2.bf16.msra.mxu0 0
        %672 = vmatprep.subr.bf16.mxu0 0
        %673 = vmatpush2.bf16.msra.mxu0 0
        %674 = vmatprep.subr.bf16.mxu0 0
        %675 = vmatpush2.bf16.msra.mxu0 0
        %676 = vmatprep.subr.bf16.mxu0 0
        %677 = vmatpush2.bf16.msra.mxu0 0
        %678 = vmatprep.subr.bf16.mxu0 0
        %679 = vmatpush2.bf16.msra.mxu0 0
        %680 = vmatprep.mubr.bf16.mxu0 0
        %681 = vmatmul.mubr.bf16.gmra.mxu0 %v646
        %v682 = vpop.f32.mrf.mxu0
        %v683 = vadd.f32 0.0, %v682
        %v684 = vpop.f32.mrf.mxu0
        %v685 = vpop.f32.mrf.mxu0
        %v686 = vadd.f32 0.0, %v685
        %v687 = vpop.f32.mrf.mxu0
        %688 = vdwg.mxu0
        %v689 = vadd.f32 %v618, %v683
        %v690 = vadd.f32 %v619, %v686
        %vm691 = vcmask 261120
        %692 = vst.msk [vmem:[#allocation3] sm:$0xff] %vm691, %v689
        %693 = vst.msk [vmem:[#allocation3 + $0x8] sm:$0xff] %vm691, %v690
        %p694 = scmp.eq.s32.totalorder %s32, 1
        // Predicated region
        $region89: #{tpu_custom_call.1} parent=79 // pred_check
          %p695 = pneg %p694
        $region90: #{tpu_custom_call.1} parent=79 // pred_check_branch
          %697 = sbr.rel (%p695) target = $region92
        $region91: #{tpu_custom_call.1} parent=79 // pred_region
          %s698 = smul.u32 %s31, 8
          %s699 = smul.addr %s698, 4
          %s700 = scalar_lea.vmem %s7, %s699
          %v701 = vld [vmem:[%s700] sm:$0xf]
          %v702 = vld [vmem:[%s700 + $0x4] sm:$0xf]
          %v703 = vld [vmem:[%s700 + $0x8] sm:$0xf]
          %v704 = vld [vmem:[%s700 + $0xc] sm:$0xf]
          %v705 = vld [vmem:[%s700 + $0x10] sm:$0xf]
          %v706 = vld [vmem:[%s700 + $0x14] sm:$0xf]
          %v707 = vld [vmem:[%s700 + $0x18] sm:$0xf]
          %v708 = vld [vmem:[%s700 + $0x1c] sm:$0xf]
          %s709 = smul.u32 %s31, 2
          %s710 = scalar_lea.vmem %s8, %s709
          %v711 = vld [vmem:[%s710] sm:$0x3]
          %v712 = vld [vmem:[#allocation2] sm:$0xff]
          %v713 = vld [vmem:[#allocation2 + $0x8] sm:$0xff]
          %v714 = vld [vmem:[#allocation3] sm:$0xff]
          %v715 = vld [vmem:[#allocation3 + $0x8] sm:$0xff]
          %v716 = vadd.f32 %v712, %v714
          %v717 = vadd.f32 %v713, %v715
          %v718 = vpack.c.bf16 %v717, %v716
          %v719 = vlaneseq
          %v720 = vshrl.u32 %v719, 7
          %v721 = vsub.s32 0, %v720
          %v722 = vrot.slane %v711, %v721
          %v727 = vunpack.c.l.b16 %v701
          %v728 = vunpack.c.l.b16 %v702
          %v729 = vunpack.c.l.b16 %v703
          %v730 = vunpack.c.l.b16 %v704
          %v731 = vpack.c.b16 %v728, %v727
          %v732 = vpack.c.b16 %v730, %v729
          %v736 = vsel %vm691, %v718, 0
          %738 = vmatprep.subr.bf16.mxu0 0
          %739 = vmatpush1.bf16.msra.mxu0 0
          %740 = vmatprep.subr.bf16.mxu0 0
          %741 = vmatpush1.bf16.msra.mxu0 0
          %742 = vmatprep.subr.bf16.mxu0 0
          %743 = vmatpush1.bf16.msra.mxu0 0
          %744 = vmatprep.subr.bf16.mxu0 0
          %745 = vmatpush1.bf16.msra.mxu0 0
          %746 = vmatprep.subr.bf16.mxu0 0
          %747 = vmatpush1.bf16.msra.mxu0 0
          %748 = vmatprep.subr.bf16.mxu0 0
          %749 = vmatpush1.bf16.msra.mxu0 0
          %750 = vmatprep.subr.bf16.mxu0 0
          %751 = vmatpush1.bf16.msra.mxu0 %v732
          %752 = vmatprep.subr.bf16.mxu0 0
          %753 = vmatpush1.bf16.msra.mxu0 %v731
          %754 = vmatprep.subr.bf16.mxu0 0
          %755 = vmatpush2.bf16.msra.mxu0 0
          %756 = vmatprep.subr.bf16.mxu0 0
          %757 = vmatpush2.bf16.msra.mxu0 0
          %758 = vmatprep.subr.bf16.mxu0 0
          %759 = vmatpush2.bf16.msra.mxu0 0
          %760 = vmatprep.subr.bf16.mxu0 0
          %761 = vmatpush2.bf16.msra.mxu0 0
          %762 = vmatprep.subr.bf16.mxu0 0
          %763 = vmatpush2.bf16.msra.mxu0 0
          %764 = vmatprep.subr.bf16.mxu0 0
          %765 = vmatpush2.bf16.msra.mxu0 0
          %766 = vmatprep.subr.bf16.mxu0 0
          %767 = vmatpush2.bf16.msra.mxu0 0
          %768 = vmatprep.subr.bf16.mxu0 0
          %769 = vmatpush2.bf16.msra.mxu0 0
          %770 = vmatprep.mubr.bf16.mxu0 0
          %771 = vmatmul.mubr.bf16.gmra.mxu0 %v736
          %v772 = vpop.f32.mrf.mxu0
          %v773 = vadd.f32 %v722, %v772
          %v774 = vpop.f32.mrf.mxu0
          %v775 = vpop.f32.mrf.mxu0
          %v776 = vadd.f32 %v722, %v775
          %v777 = vpop.f32.mrf.mxu0
          %778 = vdwg.mxu0
          %v779 = vmax.f32 %v773, 0.0
          %v780 = vmax.f32 %v776, 0.0
          %v781 = vpack.c.bf16 %v780, %v779
          %v782 = vlaneseq
          %v783 = vshrl.u32 %v782, 7
          %v784 = vsub.s32 1, %v783
          %v785 = vrot.slane %v711, %v784
          %v790 = vunpack.c.l.b16 %v705
          %v791 = vunpack.c.l.b16 %v706
          %v792 = vunpack.c.l.b16 %v707
          %v793 = vunpack.c.l.b16 %v708
          %v794 = vpack.c.b16 %v791, %v790
          %v795 = vpack.c.b16 %v793, %v792
          %v799 = vsel %vm691, %v781, 0
          %801 = vmatprep.subr.bf16.mxu0 0
          %802 = vmatpush1.bf16.msra.mxu0 0
          %803 = vmatprep.subr.bf16.mxu0 0
          %804 = vmatpush1.bf16.msra.mxu0 0
          %805 = vmatprep.subr.bf16.mxu0 0
          %806 = vmatpush1.bf16.msra.mxu0 0
          %807 = vmatprep.subr.bf16.mxu0 0
          %808 = vmatpush1.bf16.msra.mxu0 0
          %809 = vmatprep.subr.bf16.mxu0 0
          %810 = vmatpush1.bf16.msra.mxu0 0
          %811 = vmatprep.subr.bf16.mxu0 0
          %812 = vmatpush1.bf16.msra.mxu0 0
          %813 = vmatprep.subr.bf16.mxu0 0
          %814 = vmatpush1.bf16.msra.mxu0 %v795
          %815 = vmatprep.subr.bf16.mxu0 0
          %816 = vmatpush1.bf16.msra.mxu0 %v794
          %817 = vmatprep.subr.bf16.mxu0 0
          %818 = vmatpush2.bf16.msra.mxu0 0
          %819 = vmatprep.subr.bf16.mxu0 0
          %820 = vmatpush2.bf16.msra.mxu0 0
          %821 = vmatprep.subr.bf16.mxu0 0
          %822 = vmatpush2.bf16.msra.mxu0 0
          %823 = vmatprep.subr.bf16.mxu0 0
          %824 = vmatpush2.bf16.msra.mxu0 0
          %825 = vmatprep.subr.bf16.mxu0 0
          %826 = vmatpush2.bf16.msra.mxu0 0
          %827 = vmatprep.subr.bf16.mxu0 0
          %828 = vmatpush2.bf16.msra.mxu0 0
          %829 = vmatprep.subr.bf16.mxu0 0
          %830 = vmatpush2.bf16.msra.mxu0 0
          %831 = vmatprep.subr.bf16.mxu0 0
          %832 = vmatpush2.bf16.msra.mxu0 0
          %833 = vmatprep.mubr.bf16.mxu0 0
          %834 = vmatmul.mubr.bf16.gmra.mxu0 %v799
          %v835 = vpop.f32.mrf.mxu0
          %v836 = vadd.f32 %v785, %v835
          %v837 = vpop.f32.mrf.mxu0
          %v838 = vpop.f32.mrf.mxu0
          %v839 = vadd.f32 %v785, %v838
          %v840 = vpop.f32.mrf.mxu0
          %841 = vdwg.mxu0
          %842 = vst.msk [vmem:[#allocation2] sm:$0xff] %vm691, %v836
          %843 = vst.msk [vmem:[#allocation2 + $0x8] sm:$0xff] %vm691, %v839
        $region92: #{tpu_custom_call.1} parent=79 // pred_fallthru
          _
        %p844 = scmp.eq.s32.totalorder %s31, 1
        %p845 = pnand %p844, %p694
        %p846 = pneg %p845
        // Predicated region
        $region93: #{tpu_custom_call.1} parent=79 // pred_check
          _
        $region94: #{tpu_custom_call.1} parent=79 // pred_check_branch
          %848 = sbr.rel (%p845) target = $region96
        $region95: #{tpu_custom_call.1} parent=79 // pred_region
          %v849 = vld [vmem:[%s4] sm:$0x1]
          %v850 = vld [vmem:[#allocation2] sm:$0xff]
          %v851 = vld [vmem:[#allocation2 + $0x8] sm:$0xff]
          %v852 = vpack.c.bf16 %v851, %v850
          %v854 = vsel %vm571, %v849, 0
          %856 = vmatprep.subr.bf16.mxu0 0
          %857 = vmatpush1.bf16.msra.mxu0 0
          %858 = vmatprep.subr.bf16.mxu0 0
          %859 = vmatpush1.bf16.msra.mxu0 0
          %860 = vmatprep.subr.bf16.mxu0 0
          %861 = vmatpush1.bf16.msra.mxu0 0
          %862 = vmatprep.subr.bf16.mxu0 0
          %863 = vmatpush1.bf16.msra.mxu0 0
          %864 = vmatprep.subr.bf16.mxu0 0
          %865 = vmatpush1.bf16.msra.mxu0 0
          %866 = vmatprep.subr.bf16.mxu0 0
          %867 = vmatpush1.bf16.msra.mxu0 0
          %868 = vmatprep.subr.bf16.mxu0 0
          %869 = vmatpush1.bf16.msra.mxu0 0
          %870 = vmatprep.subr.bf16.mxu0 0
          %871 = vmatpush1.bf16.msra.mxu0 %v852
          %872 = vmatprep.subr.bf16.mxu0 0
          %873 = vmatpush2.bf16.msra.mxu0 0
          %874 = vmatprep.subr.bf16.mxu0 0
          %875 = vmatpush2.bf16.msra.mxu0 0
          %876 = vmatprep.subr.bf16.mxu0 0
          %877 = vmatpush2.bf16.msra.mxu0 0
          %878 = vmatprep.subr.bf16.mxu0 0
          %879 = vmatpush2.bf16.msra.mxu0 0
          %880 = vmatprep.subr.bf16.mxu0 0
          %881 = vmatpush2.bf16.msra.mxu0 0
          %882 = vmatprep.subr.bf16.mxu0 0
          %883 = vmatpush2.bf16.msra.mxu0 0
          %884 = vmatprep.subr.bf16.mxu0 0
          %885 = vmatpush2.bf16.msra.mxu0 0
          %886 = vmatprep.subr.bf16.mxu0 0
          %887 = vmatpush2.bf16.msra.mxu0 0
          %888 = vmatprep.mubr.bf16.mxu0 0
          %889 = vmatmul.mubr.bf16.gmra.mxu0 %v854
          %v890 = vpop.f32.mrf.mxu0
          %v891 = vadd.f32 0.0, %v890
          %v892 = vpop.f32.mrf.mxu0
          %v893 = vpop.f32.mrf.mxu0
          %v894 = vpop.f32.mrf.mxu0
          %895 = vdwg.mxu0
          %v896 = vld [vmem:[%s5] sm:$0x3]
          %898 = vset.pattern.permute.xlu0 0
          %899 = vperm.xlu0 %898, %v896
          %v900 = vpop.permute.xlu0 %899
          %v902 = vmul.f32 %v891, %v900
          %v903 = vpack.c.bf16 %v902, %v902
          %v904 = vld [vmem:[%s9] sm:$0xf]
          %v905 = vld [vmem:[%s9 + $0x4] sm:$0xf]
          %v906 = vld [vmem:[%s9 + $0x8] sm:$0xf]
          %v907 = vld [vmem:[%s9 + $0xc] sm:$0xf]
          %v908 = vld [vmem:[%s6] sm:$0x3]
          %v909 = vpack.c.bf16 %v908, %v908
          %v910 = vld [vmem:[%s9 + $0x10] sm:$0xf]
          %vm911 = vcmask 64512
          %v913 = vsel %vm911, %v909, 0
          %vm915 = vcmask 1043456
          %v917 = vsel %vm915, %v910, 0
          %919 = vmatprep.subr.bf16.mxu0 0
          %920 = vmatpush1.bf16.msra.mxu0 0
          %921 = vmatprep.subr.bf16.mxu0 0
          %922 = vmatpush1.bf16.msra.mxu0 0
          %923 = vmatprep.subr.bf16.mxu0 0
          %924 = vmatpush1.bf16.msra.mxu0 0
          %925 = vmatprep.subr.bf16.mxu0 0
          %926 = vmatpush1.bf16.msra.mxu0 0
          %927 = vmatprep.subr.bf16.mxu0 0
          %928 = vmatpush1.bf16.msra.mxu0 0
          %929 = vmatprep.subr.bf16.mxu0 0
          %930 = vmatpush1.bf16.msra.mxu0 0
          %931 = vmatprep.subr.bf16.mxu0 0
          %932 = vmatpush1.bf16.msra.mxu0 0
          %933 = vmatprep.subr.bf16.mxu0 0
          %934 = vmatpush1.bf16.msra.mxu0 %v917
          %935 = vmatprep.subr.bf16.mxu0 0
          %936 = vmatpush2.bf16.msra.mxu0 0
          %937 = vmatprep.subr.bf16.mxu0 0
          %938 = vmatpush2.bf16.msra.mxu0 0
          %939 = vmatprep.subr.bf16.mxu0 0
          %940 = vmatpush2.bf16.msra.mxu0 0
          %941 = vmatprep.subr.bf16.mxu0 0
          %942 = vmatpush2.bf16.msra.mxu0 0
          %943 = vmatprep.subr.bf16.mxu0 0
          %944 = vmatpush2.bf16.msra.mxu0 0
          %945 = vmatprep.subr.bf16.mxu0 0
          %946 = vmatpush2.bf16.msra.mxu0 0
          %947 = vmatprep.subr.bf16.mxu0 0
          %948 = vmatpush2.bf16.msra.mxu0 0
          %949 = vmatprep.subr.bf16.mxu0 0
          %950 = vmatpush2.bf16.msra.mxu0 0
          %951 = vmatprep.mubr.bf16.mxu0 0
          %952 = vmatmul.mubr.bf16.gmra.mxu0 %v913
          %v953 = vpop.f32.mrf.mxu0
          %v954 = vadd.f32 0.0, %v953
          %v955 = vpop.f32.mrf.mxu0
          %v956 = vpop.f32.mrf.mxu0
          %v957 = vpop.f32.mrf.mxu0
          %958 = vdwg.mxu0
          %v963 = vunpack.c.l.b16 %v904
          %v964 = vunpack.c.l.b16 %v905
          %v965 = vunpack.c.l.b16 %v906
          %v966 = vunpack.c.l.b16 %v907
          %v967 = vpack.c.b16 %v964, %v963
          %v968 = vpack.c.b16 %v966, %v965
          %v972 = vsel %vm691, %v903, 0
          %974 = vmatprep.subr.bf16.mxu0 0
          %975 = vmatpush1.bf16.msra.mxu0 0
          %976 = vmatprep.subr.bf16.mxu0 0
          %977 = vmatpush1.bf16.msra.mxu0 0
          %978 = vmatprep.subr.bf16.mxu0 0
          %979 = vmatpush1.bf16.msra.mxu0 0
          %980 = vmatprep.subr.bf16.mxu0 0
          %981 = vmatpush1.bf16.msra.mxu0 0
          %982 = vmatprep.subr.bf16.mxu0 0
          %983 = vmatpush1.bf16.msra.mxu0 0
          %984 = vmatprep.subr.bf16.mxu0 0
          %985 = vmatpush1.bf16.msra.mxu0 0
          %986 = vmatprep.subr.bf16.mxu0 0
          %987 = vmatpush1.bf16.msra.mxu0 %v968
          %988 = vmatprep.subr.bf16.mxu0 0
          %989 = vmatpush1.bf16.msra.mxu0 %v967
          %990 = vmatprep.subr.bf16.mxu0 0
          %991 = vmatpush2.bf16.msra.mxu0 0
          %992 = vmatprep.subr.bf16.mxu0 0
          %993 = vmatpush2.bf16.msra.mxu0 0
          %994 = vmatprep.subr.bf16.mxu0 0
          %995 = vmatpush2.bf16.msra.mxu0 0
          %996 = vmatprep.subr.bf16.mxu0 0
          %997 = vmatpush2.bf16.msra.mxu0 0
          %998 = vmatprep.subr.bf16.mxu0 0
          %999 = vmatpush2.bf16.msra.mxu0 0
          %1000 = vmatprep.subr.bf16.mxu0 0
          %1001 = vmatpush2.bf16.msra.mxu0 0
          %1002 = vmatprep.subr.bf16.mxu0 0
          %1003 = vmatpush2.bf16.msra.mxu0 0
          %1004 = vmatprep.subr.bf16.mxu0 0
          %1005 = vmatpush2.bf16.msra.mxu0 0
          %1006 = vmatprep.mubr.bf16.mxu0 0
          %1007 = vmatmul.mubr.bf16.gmra.mxu0 %v972
          %v1008 = vpop.f32.mrf.mxu0
          %v1009 = vadd.f32 %v954, %v1008
          %v1010 = vpop.f32.mrf.mxu0
          %v1011 = vpop.f32.mrf.mxu0
          %v1012 = vpop.f32.mrf.mxu0
          %1013 = vdwg.mxu0
          %v1014 = vld [vmem:[%s10] sm:$0x1]
          %v1016 = vlaneseq
          %v1017 = vshrl.u32 %v1016, 7
          %v1018 = vsub.s32 0, %v1017
          %v1019 = vrot.slane %v1014, %v1018
          %v1021 = vadd.f32 %v1009, %v1019
          %v1022 = vmax.f32 %v1021, 0.0
          %v1023 = vpack.c.bf16 %v1022, %v1022
          %v1024 = vld [vmem:[%s11] sm:$0xf]
          %v1025 = vld [vmem:[%s11 + $0x4] sm:$0xf]
          %v1026 = vld [vmem:[%s11 + $0x8] sm:$0xf]
          %v1027 = vld [vmem:[%s11 + $0xc] sm:$0xf]
          %v1028 = vld [vmem:[%s12] sm:$0x1]
          %v1030 = vlaneseq
          %v1031 = vshrl.u32 %v1030, 7
          %v1032 = vsub.s32 0, %v1031
          %v1033 = vrot.slane %v1028, %v1032
          %v1039 = vunpack.c.l.b16 %v1024
          %v1040 = vunpack.c.l.b16 %v1025
          %v1041 = vunpack.c.l.b16 %v1026
          %v1042 = vunpack.c.l.b16 %v1027
          %v1043 = vpack.c.b16 %v1040, %v1039
          %v1044 = vpack.c.b16 %v1042, %v1041
          %v1048 = vsel %vm691, %v1023, 0
          %1050 = vmatprep.subr.bf16.mxu0 0
          %1051 = vmatpush1.bf16.msra.mxu0 0
          %1052 = vmatprep.subr.bf16.mxu0 0
          %1053 = vmatpush1.bf16.msra.mxu0 0
          %1054 = vmatprep.subr.bf16.mxu0 0
          %1055 = vmatpush1.bf16.msra.mxu0 0
          %1056 = vmatprep.subr.bf16.mxu0 0
          %1057 = vmatpush1.bf16.msra.mxu0 0
          %1058 = vmatprep.subr.bf16.mxu0 0
          %1059 = vmatpush1.bf16.msra.mxu0 0
          %1060 = vmatprep.subr.bf16.mxu0 0
          %1061 = vmatpush1.bf16.msra.mxu0 0
          %1062 = vmatprep.subr.bf16.mxu0 0
          %1063 = vmatpush1.bf16.msra.mxu0 %v1044
          %1064 = vmatprep.subr.bf16.mxu0 0
          %1065 = vmatpush1.bf16.msra.mxu0 %v1043
          %1066 = vmatprep.subr.bf16.mxu0 0
          %1067 = vmatpush2.bf16.msra.mxu0 0
          %1068 = vmatprep.subr.bf16.mxu0 0
          %1069 = vmatpush2.bf16.msra.mxu0 0
          %1070 = vmatprep.subr.bf16.mxu0 0
          %1071 = vmatpush2.bf16.msra.mxu0 0
          %1072 = vmatprep.subr.bf16.mxu0 0
          %1073 = vmatpush2.bf16.msra.mxu0 0
          %1074 = vmatprep.subr.bf16.mxu0 0
          %1075 = vmatpush2.bf16.msra.mxu0 0
          %1076 = vmatprep.subr.bf16.mxu0 0
          %1077 = vmatpush2.bf16.msra.mxu0 0
          %1078 = vmatprep.subr.bf16.mxu0 0
          %1079 = vmatpush2.bf16.msra.mxu0 0
          %1080 = vmatprep.subr.bf16.mxu0 0
          %1081 = vmatpush2.bf16.msra.mxu0 0
          %1082 = vmatprep.mubr.bf16.mxu0 0
          %1083 = vmatmul.mubr.bf16.gmra.mxu0 %v1048
          %v1084 = vpop.f32.mrf.mxu0
          %v1085 = vadd.f32 %v1033, %v1084
          %v1086 = vpop.f32.mrf.mxu0
          %v1087 = vpop.f32.mrf.mxu0
          %v1088 = vpop.f32.mrf.mxu0
          %1089 = vdwg.mxu0
          %v1090 = vmax.f32 %v1085, 0.0
          %v1091 = vpack.c.bf16 %v1090, %v1090
          %v1092 = vld [vmem:[%s13] sm:$0xf]
          %v1093 = vld [vmem:[%s13 + $0x4] sm:$0xf]
          %v1094 = vld [vmem:[%s14] sm:$0x1]
          %v1096 = vlaneseq
          %v1097 = vshrl.u32 %v1096, 7
          %v1098 = vsub.s32 0, %v1097
          %v1099 = vrot.slane %v1094, %v1098
          %v1103 = vunpack.c.l.b16 %v1092
          %v1104 = vunpack.c.l.b16 %v1093
          %v1105 = vpack.c.b16 %v1104, %v1103
          %v1108 = vsel %vm571, %v1091, 0
          %1110 = vmatprep.subr.bf16.mxu0 0
          %1111 = vmatpush1.bf16.msra.mxu0 0
          %1112 = vmatprep.subr.bf16.mxu0 0
          %1113 = vmatpush1.bf16.msra.mxu0 0
          %1114 = vmatprep.subr.bf16.mxu0 0
          %1115 = vmatpush1.bf16.msra.mxu0 0
          %1116 = vmatprep.subr.bf16.mxu0 0
          %1117 = vmatpush1.bf16.msra.mxu0 0
          %1118 = vmatprep.subr.bf16.mxu0 0
          %1119 = vmatpush1.bf16.msra.mxu0 0
          %1120 = vmatprep.subr.bf16.mxu0 0
          %1121 = vmatpush1.bf16.msra.mxu0 0
          %1122 = vmatprep.subr.bf16.mxu0 0
          %1123 = vmatpush1.bf16.msra.mxu0 0
          %1124 = vmatprep.subr.bf16.mxu0 0
          %1125 = vmatpush1.bf16.msra.mxu0 %v1105
          %1126 = vmatprep.subr.bf16.mxu0 0
          %1127 = vmatpush2.bf16.msra.mxu0 0
          %1128 = vmatprep.subr.bf16.mxu0 0
          %1129 = vmatpush2.bf16.msra.mxu0 0
          %1130 = vmatprep.subr.bf16.mxu0 0
          %1131 = vmatpush2.bf16.msra.mxu0 0
          %1132 = vmatprep.subr.bf16.mxu0 0
          %1133 = vmatpush2.bf16.msra.mxu0 0
          %1134 = vmatprep.subr.bf16.mxu0 0
          %1135 = vmatpush2.bf16.msra.mxu0 0
          %1136 = vmatprep.subr.bf16.mxu0 0
          %1137 = vmatpush2.bf16.msra.mxu0 0
          %1138 = vmatprep.subr.bf16.mxu0 0
          %1139 = vmatpush2.bf16.msra.mxu0 0
          %1140 = vmatprep.subr.bf16.mxu0 0
          %1141 = vmatpush2.bf16.msra.mxu0 0
          %1142 = vmatprep.mubr.bf16.mxu0 0
          %1143 = vmatmul.mubr.bf16.gmra.mxu0 %v1108
          %v1144 = vpop.f32.mrf.mxu0
          %v1145 = vadd.f32 %v1099, %v1144
          %v1146 = vpop.f32.mrf.mxu0
          %v1147 = vpop.f32.mrf.mxu0
          %v1148 = vpop.f32.mrf.mxu0
          %1149 = vdwg.mxu0
          %1150 = vst [vmem:[#allocation4] sm:$0x3] %v1145
        $region96: #{tpu_custom_call.1} parent=79 // pred_fallthru
          _
        // Predicated region
        $region97: #{tpu_custom_call.1} parent=79 // pred_check
          %p1151 = pneg %p382
        $region98: #{tpu_custom_call.1} parent=79 // pred_check_branch
          %1153 = sbr.rel (%p1151) target = $region100
        $region99: #{tpu_custom_call.1} parent=79 // pred_region
          %s1155 = ssub.s32 32, 32
          %1156 = vsyncadd [#allocation5], %s1155
          %s1158 = sshll.u32 [#allocation4], 4
          %s1159 = int_to_ptr.vmem [resolvable:$true] %s1158
          %1161 = dma.vmem_to_hbm [thread:$0]  %s1159, 32, %s15, [#allocation5]
        $region100: #{tpu_custom_call.1} parent=79 // pred_fallthru
          _
        // Predicated region
        $region101: #{tpu_custom_call.1} parent=79 // pred_check
          %p1162 = pneg %p382
        $region102: #{tpu_custom_call.1} parent=79 // pred_check_branch
          %1164 = sbr.rel (%p1162) target = $region104
        $region103: #{tpu_custom_call.1} parent=79 // pred_region
          %1165 = dma.done [#allocation5], 32
        $region104: #{tpu_custom_call.1} parent=79 // pred_fallthru
          _
      $region80: #{tpu_custom_call.1} parent=5 // pred_fallthru
        _
      %p1166 = scmp.le.s32.totalorder 2, %s22
      // Predicated region
      $region105: #{tpu_custom_call.1} parent=5 // pred_check
        %p1167 = pneg %p1166
      $region106: #{tpu_custom_call.1} parent=5 // pred_check_branch
        %1169 = sbr.rel (%p1167) target = $region108
      $region107: #{tpu_custom_call.1} parent=5 // pred_region
        %s1170 = ssub.s32 %s22, 2
      $region108: #{tpu_custom_call.1} parent=5 // pred_fallthru
        _
    $region6: #{tpu_custom_call.1} parent=1 // loop_footer
      %s26 = sadd.s32 1, %s22
    $region7: #{tpu_custom_call.1} parent=1 // loop_footer_branch
      %21 = sbr.rel target = $region3
    $region8: #{tpu_custom_call.1} parent=1 // loop_exit
      _
    %1171 = vsyncpa [#allocation5], 1
    %s1172 = scalar_lea.sflag [#allocation5], 1
    %1173 = vsyncpa %s1172, 1

</llo_original>
